<compile_context>
chip_gen: v7x
topology: tpu7x:2x2x1
jax: 0.10.0
libtpu: 0.0.40
codegen_flags: <defaults>
</compile_context>

<pallas_src>
import functools
import math

import jax
import jax.numpy as jnp
from jax.experimental import pallas as pl
from jax.experimental.pallas import tpu as pltpu


def _round_up(x, m):
    return (x + m - 1) // m * m


def _num_tensorcores():
    # Only v7x has 2 TensorCores per chip; everything else (and interpret mode)
    # is treated as a single sequential core.
    try:
        kind = (getattr(jax.devices()[0], "device_kind", "") or "").lower()
        if "v7" in kind:
            return 2
    except Exception:
        pass
    return 1


def _local_attn_kernel(embs_ref, mask_ref, wt_ref, b_ref, o_ref, *,
                       query_index, inv_sqrt_h):
    # embs_ref: (B, T, H)   mask_ref: (B, T) int32   wt_ref: (H, H)   b_ref: (1, H)
    # o_ref:    (B, H)
    B, T, H = embs_ref.shape
    x = embs_ref[...]                                    # native dtype (B, T, H)

    # hidden_map: tanh(x @ W^T + b) as one tall MXU matmul with f32 accumulation
    # (W was pre-transposed in the wrapper; T is sublane-padded, so the reshape
    # is a zero-cost layout merge).
    h = jnp.tanh(
        jnp.dot(x.reshape(B * T, H), wt_ref[...],
                preferred_element_type=jnp.float32)
        + b_ref[...]
    ).reshape(B, T, H)                                   # f32

    # query token of every sentence (raw embedding, per the torch module),
    # pre-scaled by 1/sqrt(H) so the softmax temperature is folded in here.
    q = x[:, query_index, :].astype(jnp.float32) * jnp.float32(inv_sqrt_h)

    # attention logits, masked with -inf to match the torch reference
    logits = jnp.sum(h * q[:, None, :], axis=2)          # (B, T) f32
    logits = jnp.where(mask_ref[...] > 0, logits, jnp.float32(-jnp.inf))

    # numerically-stable softmax over tokens (exact divide: the approx EUP
    # reciprocal is not accurate enough for the normalization).
    m = jnp.max(logits, axis=1, keepdims=True)
    p = jnp.exp(logits - m)
    denom = jnp.sum(p, axis=1, keepdims=True)
    score = p / denom                                     # (B, T) f32
    # NOTE: a fully-masked sentence gives denom == 0 -> NaN row, matching the
    # torch softmax-of-all--inf behavior.

    # weighted sum of token embeddings -> dense (B, H) output slab
    out = jnp.sum(score[:, :, None] * x.astype(jnp.float32), axis=1)  # (B, H)
    o_ref[...] = out.astype(o_ref.dtype)


def local_attentive_aggregation(embs, emb_mask, weight, bias,
                                query_cls=False, block_b=None,
                                target_block_bytes=2 << 20):
    """
    embs:     [bsz, num_sent, num_token, hidden]
    emb_mask: [bsz, num_sent, num_token] (bool)
    weight:   [hidden, hidden]  (nn.Linear weight, [out, in])
    bias:     [hidden]
    Return:   [bsz, num_sent, hidden]
    """
    bsz, num_sent, num_token, hidden = embs.shape
    query_index = 0 if query_cls else 1
    bs = bsz * num_sent
    itemsize = jnp.dtype(embs.dtype).itemsize

    # Pad the token axis to a sublane multiple (8 for f32, 16 for bf16) so the
    # in-kernel (B*T, H) reshape never crosses (8, 128) tile boundaries.
    sublane = max(8, 32 // itemsize)
    t_pad = _round_up(num_token, sublane)

    embs_f = embs.reshape(bs, num_token, hidden)
    mask_f = emb_mask.reshape(bs, num_token).astype(jnp.int32)
    if t_pad != num_token:
        embs_f = jnp.pad(embs_f, ((0, 0), (0, t_pad - num_token), (0, 0)))
        mask_f = jnp.pad(mask_f, ((0, 0), (0, t_pad - num_token)))  # pad tokens masked off

    if block_b is None:
        # Biggest block that keeps the embs buffer around target_block_bytes
        # (~2 MiB => ~85% of the HBM roofline), multiple of 8 sublanes.
        per_row_bytes = t_pad * hidden * itemsize
        block_b = max(8, _round_up(max(1, target_block_bytes // per_row_bytes), 8))
        block_b = min(block_b, _round_up(bs, 8))
        # v7x only: keep an even number of >= 2 parallel steps so both
        # TensorCores get work; on v5e/v6e the grid is serial, so splitting
        # would only add per-step overhead.
        if _num_tensorcores() >= 2 and bs > 8:
            steps = -(-_round_up(bs, 8) // block_b)
            if steps < 2 or steps % 2:
                steps = max(2, steps + (steps % 2))
                block_b = max(8, _round_up(-(-bs // steps), 8))

    bs_pad = _round_up(bs, block_b)
    if bs_pad != bs:
        pad = bs_pad - bs
        embs_f = jnp.pad(embs_f, ((0, pad), (0, 0), (0, 0)))
        # padded rows get an all-valid mask (keeps them finite; sliced off below)
        mask_f = jnp.pad(mask_f, ((0, pad), (0, 0)), constant_values=1)

    w_t = weight.T                       # [H_in, H_out] so kernel does x @ w_t
    b2 = bias.reshape(1, hidden)

    kernel = functools.partial(
        _local_attn_kernel, query_index=query_index,
        inv_sqrt_h=1.0 / math.sqrt(hidden))

    # VMEM budget: double-buffered embs input + f32 temporaries (h, products,
    # softmax) + resident W/b + output. Explicit limit so the block sizing is
    # honored on v5e (16 MiB default scoped) without blowing v7x's 64 MiB.
    embs_block = block_b * t_pad * hidden * itemsize
    vmem_est = (2 * embs_block
                + 5 * block_b * t_pad * hidden * 4
                + 2 * block_b * hidden * (4 + itemsize)
                + 2 * (hidden * hidden + hidden) * 4
                + 2 * block_b * t_pad * 4)
    vmem_limit = int(min(64 << 20, max(32 << 20, vmem_est * 3 // 2)))

    cost = pl.CostEstimate(
        flops=2 * bs_pad * t_pad * hidden * hidden + 6 * bs_pad * t_pad * hidden,
        transcendentals=bs_pad * t_pad * (hidden + 1),
        bytes_accessed=(bs_pad * t_pad * hidden * itemsize      # embs
                        + bs_pad * hidden * itemsize            # output
                        + bs_pad * t_pad * 4                    # mask
                        + (hidden * hidden + hidden) * 4))      # weight/bias

    out = pl.pallas_call(
        kernel,
        out_shape=jax.ShapeDtypeStruct((bs_pad, hidden), embs.dtype),
        grid=(bs_pad // block_b,),
        in_specs=[
            pl.BlockSpec((block_b, t_pad, hidden), lambda i: (i, 0, 0)),
            pl.BlockSpec((block_b, t_pad), lambda i: (i, 0)),
            pl.BlockSpec((hidden, hidden), lambda i: (0, 0)),   # resident weight
            pl.BlockSpec((1, hidden), lambda i: (0, 0)),        # resident bias
        ],
        out_specs=pl.BlockSpec((block_b, hidden), lambda i: (i, 0)),
        compiler_params=pltpu.CompilerParams(
            dimension_semantics=("parallel",),
            vmem_limit_bytes=vmem_limit),
        cost_estimate=cost,
    )(embs_f, mask_f, w_t, b2)

    return out[:bs].reshape(bsz, num_sent, hidden)


def reference(embs, emb_mask, weight, bias, query_cls=False):
    """Pure-JAX reference matching the PyTorch forward exactly."""
    query_index = 0 if query_cls else 1
    hidden = embs.shape[-1]
    h = jnp.tanh(jnp.einsum("bsth,oh->bsto", embs, weight,
                            precision=jax.lax.Precision.HIGHEST) + bias)
    q = embs[:, :, query_index, :]                                # [b, s, H]
    logit = jnp.sum(h * q[:, :, None, :], axis=-1)                # [b, s, T]
    logit = jnp.where(emb_mask, logit, -jnp.inf)
    score = jax.nn.softmax(logit / jnp.sqrt(jnp.float32(hidden)), axis=-1)
    return jnp.sum(score[..., None] * embs, axis=2)               # [b, s, H]


if __name__ == "__main__":
    bsz, num_sent, num_token, hidden = 4, 16, 8, 128   # fused batch bs = 64

    key = jax.random.PRNGKey(0)
    k_emb, k_len, k_w, k_b = jax.random.split(key, 4)

    embs = jax.random.normal(k_emb, (bsz, num_sent, num_token, hidden),
                             dtype=jnp.float32)
    # every sentence has at least 3 valid tokens (avoids all-masked NaN rows)
    lengths = jax.random.randint(k_len, (bsz, num_sent), 3, num_token + 1)
    emb_mask = jnp.arange(num_token)[None, None, :] < lengths[:, :, None]

    # deterministic synthetic Linear(hidden, hidden) parameters
    weight = 0.05 * jax.random.normal(k_w, (hidden, hidden), dtype=jnp.float32)
    bias = 0.01 * jax.random.normal(k_b, (hidden,), dtype=jnp.float32)

    out = local_attentive_aggregation(embs, emb_mask, weight, bias)
    out = jax.block_until_ready(out)

    ref = reference(embs, emb_mask, weight, bias)
    assert out.shape == (bsz, num_sent, hidden)
    assert jnp.allclose(out, ref, rtol=2e-3, atol=2e-3), (
        f"max abs diff: {jnp.max(jnp.abs(out - ref))}")

    print("KERNEL_OK")
</pallas_src>

<mosaic_0001>
module attributes {stable_mosaic.version = 11 : i64} {
  func.func @_local_attn_kernel(%arg0: i32, %arg1: memref<64x8x128xf32, #tpu.memory_space<vmem>>, %arg2: memref<64x8xi32, #tpu.memory_space<vmem>>, %arg3: memref<128x128xf32, #tpu.memory_space<vmem>>, %arg4: memref<1x128xf32, #tpu.memory_space<vmem>>, %arg5: memref<64x128xf32, #tpu.memory_space<vmem>>) attributes {dimension_semantics = [#tpu.dimension_semantics<parallel>], iteration_bounds = array<i64: 1>, scalar_prefetch = 0 : i64, scratch_operands = 0 : i64, tpu.core_type = #tpu.core_type<tc>, window_params = [{transform_indices = @transform_0, window_bounds = array<i64: 64, 8, 128>}, {transform_indices = @transform_1, window_bounds = array<i64: 64, 8>}, {pipeline_mode = #tpu.pipeline_mode<synchronous>, transform_indices = @transform_2, window_bounds = array<i64: 128, 128>}, {pipeline_mode = #tpu.pipeline_mode<synchronous>, transform_indices = @transform_3, window_bounds = array<i64: 1, 128>}, {transform_indices = @transform_4, window_bounds = array<i64: 64, 128>}]} {
    %c0 = arith.constant 0 : index
    %c0_0 = arith.constant 0 : index
    %c0_1 = arith.constant 0 : index
    %0 = vector.load %arg1[%c0, %c0_0, %c0_1] : memref<64x8x128xf32, #tpu.memory_space<vmem>>, vector<64x8x128xf32>
    %1 = vector.shape_cast %0 : vector<64x8x128xf32> to vector<512x128xf32>
    %c0_2 = arith.constant 0 : index
    %c0_3 = arith.constant 0 : index
    %2 = vector.load %arg3[%c0_2, %c0_3] : memref<128x128xf32, #tpu.memory_space<vmem>>, vector<128x128xf32>
    %cst = arith.constant dense<0.000000e+00> : vector<512x128xf32>
    %3 = tpu.matmul %1, %2, %cst {dimension_numbers = #tpu.dot_dimension_numbers<[1], [0], [0], [1], [0, 0, 1, 1], [], []>} : vector<512x128xf32>, vector<128x128xf32>, vector<512x128xf32> -> vector<512x128xf32>
    %c0_4 = arith.constant 0 : index
    %c0_5 = arith.constant 0 : index
    %4 = vector.load %arg4[%c0_4, %c0_5] : memref<1x128xf32, #tpu.memory_space<vmem>>, vector<1x128xf32>
    %5 = vector.broadcast %4 : vector<1x128xf32> to vector<512x128xf32>
    %6 = arith.addf %3, %5 : vector<512x128xf32>
    %7 = math.tanh %6 : vector<512x128xf32>
    %8 = vector.shape_cast %7 : vector<512x128xf32> to vector<64x8x128xf32>
    %9 = vector.extract_strided_slice %0 {offsets = [0, 1, 0], sizes = [64, 1, 128], strides = [1, 1, 1]} : vector<64x8x128xf32> to vector<64x1x128xf32>
    %10 = vector.shape_cast %9 : vector<64x1x128xf32> to vector<64x128xf32>
    %cst_6 = arith.constant 0.0883883461 : f32
    %11 = vector.broadcast %cst_6 : f32 to vector<64x128xf32>
    %12 = arith.mulf %10, %11 : vector<64x128xf32>
    %13 = vector.shape_cast %12 : vector<64x128xf32> to vector<64x1x128xf32>
    %14 = vector.broadcast %13 : vector<64x1x128xf32> to vector<64x8x128xf32>
    %15 = arith.mulf %8, %14 : vector<64x8x128xf32>
    %cst_7 = arith.constant dense<0.000000e+00> : vector<64x8xf32>
    %16 = vector.multi_reduction <add>, %15, %cst_7 [2] : vector<64x8x128xf32> to vector<64x8xf32>
    %c0_8 = arith.constant 0 : index
    %c0_9 = arith.constant 0 : index
    %17 = vector.load %arg2[%c0_8, %c0_9] : memref<64x8xi32, #tpu.memory_space<vmem>>, vector<64x8xi32>
    %c0_i32 = arith.constant 0 : i32
    %18 = vector.broadcast %c0_i32 : i32 to vector<64x8xi32>
    %19 = arith.cmpi sgt, %17, %18 : vector<64x8xi32>
    %cst_10 = arith.constant 0xFF800000 : f32
    %20 = vector.broadcast %cst_10 : f32 to vector<64x8xf32>
    %21 = arith.select %19, %16, %20 : vector<64x8xi1>, vector<64x8xf32>
    %cst_11 = arith.constant dense<0xFF800000> : vector<64xf32>
    %22 = vector.multi_reduction <maximumf>, %21, %cst_11 [1] : vector<64x8xf32> to vector<64xf32>
    %23 = vector.shape_cast %22 : vector<64xf32> to vector<64x1xf32>
    %24 = vector.broadcast %23 : vector<64x1xf32> to vector<64x8xf32>
    %25 = arith.subf %21, %24 : vector<64x8xf32>
    %26 = math.exp %25 : vector<64x8xf32>
    %cst_12 = arith.constant dense<0.000000e+00> : vector<64xf32>
    %27 = vector.multi_reduction <add>, %26, %cst_12 [1] : vector<64x8xf32> to vector<64xf32>
    %28 = vector.shape_cast %27 : vector<64xf32> to vector<64x1xf32>
    %29 = vector.broadcast %28 : vector<64x1xf32> to vector<64x8xf32>
    %30 = arith.divf %26, %29 : vector<64x8xf32>
    %31 = vector.shape_cast %30 : vector<64x8xf32> to vector<64x8x1xf32>
    %32 = vector.broadcast %31 : vector<64x8x1xf32> to vector<64x8x128xf32>
    %33 = arith.mulf %32, %0 : vector<64x8x128xf32>
    %cst_13 = arith.constant dense<0.000000e+00> : vector<64x128xf32>
    %34 = vector.multi_reduction <add>, %33, %cst_13 [1] : vector<64x8x128xf32> to vector<64x128xf32>
    %c0_14 = arith.constant 0 : index
    %c0_15 = arith.constant 0 : index
    %35 = vector.load %arg5[%c0_14, %c0_15] : memref<64x128xf32, #tpu.memory_space<vmem>>, vector<64x128xf32>
    tpu.vector_store %arg5[%c0_14, %c0_15], %34 {strides = array<i32>} : memref<64x128xf32, #tpu.memory_space<vmem>>, vector<64x128xf32>,
    return
  }
  func.func @transform_0(%arg0: i32) -> (i32, i32, i32) {
    %c0_i32 = arith.constant 0 : i32
    %c0_i32_0 = arith.constant 0 : i32
    %c0_i32_1 = arith.constant 0 : i32
    return %arg0, %c0_i32, %c0_i32_0 : i32, i32, i32
  }
  func.func @transform_1(%arg0: i32) -> (i32, i32) {
    %c0_i32 = arith.constant 0 : i32
    %c0_i32_0 = arith.constant 0 : i32
    return %arg0, %c0_i32 : i32, i32
  }
  func.func @transform_2(%arg0: i32) -> (i32, i32) {
    %c0_i32 = arith.constant 0 : i32
    %c0_i32_0 = arith.constant 0 : i32
    %c0_i32_1 = arith.constant 0 : i32
    return %c0_i32, %c0_i32_0 : i32, i32
  }
  func.func @transform_3(%arg0: i32) -> (i32, i32) {
    %c0_i32 = arith.constant 0 : i32
    %c0_i32_0 = arith.constant 0 : i32
    %c0_i32_1 = arith.constant 0 : i32
    return %c0_i32, %c0_i32_0 : i32, i32
  }
  func.func @transform_4(%arg0: i32) -> (i32, i32) {
    %c0_i32 = arith.constant 0 : i32
    %c0_i32_0 = arith.constant 0 : i32
    return %arg0, %c0_i32 : i32, i32
  }
}

</mosaic_0001>

<llo_original>
// kernel: tpu_custom_call.1
$region0: #{tpu_custom_call.1}
  #allocation0 [shape = 'u32[]', space=smem, size = 0x4, offset = 0x4, fixed_abs, tag = 'smem constant byte address 0x4 - core index']
  #allocation1 [shape = 'u32[144,128]{1,0:T(1,128)}', space=vmem, size = 0x12000, scoped, tag = 'internal scratch']
  %s0 = inlined_call_operand.hbm [shape: f32[64,8,128], index: 0, kind: input, shape index: {}]
  %s1 = inlined_call_operand.vmem [shape: s32[64,8], index: 1, kind: input, shape index: {}]
  %s2 = inlined_call_operand.hbm [shape: f32[128,128], index: 2, kind: input, shape index: {}]
  %s3 = inlined_call_operand.vmem [shape: f32[1,128], index: 3, kind: input, shape index: {}]
  %s4 = inlined_call_operand.hbm [shape: f32[64,128], index: 4, kind: output, shape index: {}]
  %s5 = sld [smem:[#allocation0]]
  $region34: #{tpu_custom_call.1} parent=0
    _
  %s7 = ssub.s32 1, %s5
  %s8 = scalar_select 0, %s7, %s5
  $region1: #{tpu_custom_call.1} parent=0
    #allocation2 [shape = 'u8[262144]{0}', space=vmem, size = 0x40000, scoped, tag = 'input window, operand 0, single buffered']
    #allocation3 [shape = 's32[1]{0}', space=sflag, size = 0x4, scoped, tag = 'scoped memory for tpu_custom_call.1']
    #allocation4 [shape = 's32[1]{0}', space=sflag, size = 0x4, scoped, tag = 'scoped memory for tpu_custom_call.1']
    #allocation5 [shape = 'u8[65536]{0}', space=vmem, size = 0x10000, scoped, tag = 'input window, operand 2, single buffered']
    #allocation6 [shape = 's32[1]{0}', space=sflag, size = 0x4, scoped, tag = 'scoped memory for tpu_custom_call.1']
    #allocation7 [shape = 'u8[32768]{0}', space=vmem, size = 0x8000, scoped, tag = 'output window, operand 0, single buffered']
    %9 = vsyncpa [#allocation3], 0
    %10 = vsyncpa [#allocation6], 0
    %11 = vsyncpa [#allocation4], 0
    // Predicated region
    $region2: #{tpu_custom_call.1} parent=1 // pred_check
      _
    $region3: #{tpu_custom_call.1} parent=1 // pred_check_branch
      %13 = sbr.rel (0) target = $region5
    $region4: #{tpu_custom_call.1} parent=1 // pred_region
      %s15 = ssub.s32 8192, 8192
      %16 = vsyncadd [#allocation3], %s15
      %s17 = sshll.u32 [#allocation2], 4
      %s18 = int_to_ptr.vmem [resolvable:$true] %s17
      %23 = dma.hbm_to_vmem [thread:$0]  %s0, 8192, %s18, [#allocation3], 128, 128, 8
    $region5: #{tpu_custom_call.1} parent=1 // pred_fallthru
      _
    // Predicated region
    $region6: #{tpu_custom_call.1} parent=1 // pred_check
      _
    $region7: #{tpu_custom_call.1} parent=1 // pred_check_branch
      %25 = sbr.rel (0) target = $region9
    $region8: #{tpu_custom_call.1} parent=1 // pred_region
      _
    $region9: #{tpu_custom_call.1} parent=1 // pred_fallthru
      _
    // Predicated region
    $region10: #{tpu_custom_call.1} parent=1 // pred_check
      _
    $region11: #{tpu_custom_call.1} parent=1 // pred_check_branch
      %27 = sbr.rel (0) target = $region13
    $region12: #{tpu_custom_call.1} parent=1 // pred_region
      %s29 = ssub.s32 2048, 2048
      %30 = vsyncadd [#allocation6], %s29
      %s31 = sshll.u32 [#allocation5], 4
      %s32 = int_to_ptr.vmem [resolvable:$true] %s31
      %37 = dma.hbm_to_vmem [thread:$0]  %s2, 2048, %s32, [#allocation6], 128, 128, 8
    $region13: #{tpu_custom_call.1} parent=1 // pred_fallthru
      _
    // Predicated region
    $region14: #{tpu_custom_call.1} parent=1 // pred_check
      _
    $region15: #{tpu_custom_call.1} parent=1 // pred_check_branch
      %39 = sbr.rel (0) target = $region17
    $region16: #{tpu_custom_call.1} parent=1 // pred_region
      _
    $region17: #{tpu_custom_call.1} parent=1 // pred_fallthru
      _
    // Predicated region
    $region18: #{tpu_custom_call.1} parent=1 // pred_check
      _
    $region19: #{tpu_custom_call.1} parent=1 // pred_check_branch
      %41 = sbr.rel (0) target = $region21
    $region20: #{tpu_custom_call.1} parent=1 // pred_region
      %42 = dma.done [#allocation3], 8192
    $region21: #{tpu_custom_call.1} parent=1 // pred_fallthru
      _
    // Predicated region
    $region22: #{tpu_custom_call.1} parent=1 // pred_check
      _
    $region23: #{tpu_custom_call.1} parent=1 // pred_check_branch
      %44 = sbr.rel (0) target = $region25
    $region24: #{tpu_custom_call.1} parent=1 // pred_region
      %45 = dma.done [#allocation6], 2048
    $region25: #{tpu_custom_call.1} parent=1 // pred_fallthru
      _
    %v46 = vld [vmem:[#allocation2] sm:$0xff]
    %v47 = vld [vmem:[#allocation2 + $0x8] sm:$0xff]
    %v48 = vld [vmem:[#allocation2 + $0x10] sm:$0xff]
    %v49 = vld [vmem:[#allocation2 + $0x18] sm:$0xff]
    %v50 = vld [vmem:[#allocation2 + $0x20] sm:$0xff]
    %v51 = vld [vmem:[#allocation2 + $0x28] sm:$0xff]
    %v52 = vld [vmem:[#allocation2 + $0x30] sm:$0xff]
    %v53 = vld [vmem:[#allocation2 + $0x38] sm:$0xff]
    %v54 = vld [vmem:[#allocation2 + $0x40] sm:$0xff]
    %v55 = vld [vmem:[#allocation2 + $0x48] sm:$0xff]
    %v56 = vld [vmem:[#allocation2 + $0x50] sm:$0xff]
    %v57 = vld [vmem:[#allocation2 + $0x58] sm:$0xff]
    %v58 = vld [vmem:[#allocation2 + $0x60] sm:$0xff]
    %v59 = vld [vmem:[#allocation2 + $0x68] sm:$0xff]
    %v60 = vld [vmem:[#allocation2 + $0x70] sm:$0xff]
    %v61 = vld [vmem:[#allocation2 + $0x78] sm:$0xff]
    %v62 = vld [vmem:[#allocation2 + $0x80] sm:$0xff]
    %v63 = vld [vmem:[#allocation2 + $0x88] sm:$0xff]
    %v64 = vld [vmem:[#allocation2 + $0x90] sm:$0xff]
    %v65 = vld [vmem:[#allocation2 + $0x98] sm:$0xff]
    %v66 = vld [vmem:[#allocation2 + $0xa0] sm:$0xff]
    %v67 = vld [vmem:[#allocation2 + $0xa8] sm:$0xff]
    %v68 = vld [vmem:[#allocation2 + $0xb0] sm:$0xff]
    %v69 = vld [vmem:[#allocation2 + $0xb8] sm:$0xff]
    %v70 = vld [vmem:[#allocation2 + $0xc0] sm:$0xff]
    %v71 = vld [vmem:[#allocation2 + $0xc8] sm:$0xff]
    %v72 = vld [vmem:[#allocation2 + $0xd0] sm:$0xff]
    %v73 = vld [vmem:[#allocation2 + $0xd8] sm:$0xff]
    %v74 = vld [vmem:[#allocation2 + $0xe0] sm:$0xff]
    %v75 = vld [vmem:[#allocation2 + $0xe8] sm:$0xff]
    %v76 = vld [vmem:[#allocation2 + $0xf0] sm:$0xff]
    %v77 = vld [vmem:[#allocation2 + $0xf8] sm:$0xff]
    %v78 = vld [vmem:[#allocation2 + $0x100] sm:$0xff]
    %v79 = vld [vmem:[#allocation2 + $0x108] sm:$0xff]
    %v80 = vld [vmem:[#allocation2 + $0x110] sm:$0xff]
    %v81 = vld [vmem:[#allocation2 + $0x118] sm:$0xff]
    %v82 = vld [vmem:[#allocation2 + $0x120] sm:$0xff]
    %v83 = vld [vmem:[#allocation2 + $0x128] sm:$0xff]
    %v84 = vld [vmem:[#allocation2 + $0x130] sm:$0xff]
    %v85 = vld [vmem:[#allocation2 + $0x138] sm:$0xff]
    %v86 = vld [vmem:[#allocation2 + $0x140] sm:$0xff]
    %v87 = vld [vmem:[#allocation2 + $0x148] sm:$0xff]
    %v88 = vld [vmem:[#allocation2 + $0x150] sm:$0xff]
    %v89 = vld [vmem:[#allocation2 + $0x158] sm:$0xff]
    %v90 = vld [vmem:[#allocation2 + $0x160] sm:$0xff]
    %v91 = vld [vmem:[#allocation2 + $0x168] sm:$0xff]
    %v92 = vld [vmem:[#allocation2 + $0x170] sm:$0xff]
    %v93 = vld [vmem:[#allocation2 + $0x178] sm:$0xff]
    %v94 = vld [vmem:[#allocation2 + $0x180] sm:$0xff]
    %v95 = vld [vmem:[#allocation2 + $0x188] sm:$0xff]
    %v96 = vld [vmem:[#allocation2 + $0x190] sm:$0xff]
    %v97 = vld [vmem:[#allocation2 + $0x198] sm:$0xff]
    %v98 = vld [vmem:[#allocation2 + $0x1a0] sm:$0xff]
    %v99 = vld [vmem:[#allocation2 + $0x1a8] sm:$0xff]
    %v100 = vld [vmem:[#allocation2 + $0x1b0] sm:$0xff]
    %v101 = vld [vmem:[#allocation2 + $0x1b8] sm:$0xff]
    %v102 = vld [vmem:[#allocation2 + $0x1c0] sm:$0xff]
    %v103 = vld [vmem:[#allocation2 + $0x1c8] sm:$0xff]
    %v104 = vld [vmem:[#allocation2 + $0x1d0] sm:$0xff]
    %v105 = vld [vmem:[#allocation2 + $0x1d8] sm:$0xff]
    %v106 = vld [vmem:[#allocation2 + $0x1e0] sm:$0xff]
    %v107 = vld [vmem:[#allocation2 + $0x1e8] sm:$0xff]
    %v108 = vld [vmem:[#allocation2 + $0x1f0] sm:$0xff]
    %v109 = vld [vmem:[#allocation2 + $0x1f8] sm:$0xff]
    %v110 = vld [vmem:[#allocation5] sm:$0xff]
    %v111 = vld [vmem:[#allocation5 + $0x8] sm:$0xff]
    %v112 = vld [vmem:[#allocation5 + $0x10] sm:$0xff]
    %v113 = vld [vmem:[#allocation5 + $0x18] sm:$0xff]
    %v114 = vld [vmem:[#allocation5 + $0x20] sm:$0xff]
    %v115 = vld [vmem:[#allocation5 + $0x28] sm:$0xff]
    %v116 = vld [vmem:[#allocation5 + $0x30] sm:$0xff]
    %v117 = vld [vmem:[#allocation5 + $0x38] sm:$0xff]
    %v118 = vld [vmem:[#allocation5 + $0x40] sm:$0xff]
    %v119 = vld [vmem:[#allocation5 + $0x48] sm:$0xff]
    %v120 = vld [vmem:[#allocation5 + $0x50] sm:$0xff]
    %v121 = vld [vmem:[#allocation5 + $0x58] sm:$0xff]
    %v122 = vld [vmem:[#allocation5 + $0x60] sm:$0xff]
    %v123 = vld [vmem:[#allocation5 + $0x68] sm:$0xff]
    %v124 = vld [vmem:[#allocation5 + $0x70] sm:$0xff]
    %v125 = vld [vmem:[#allocation5 + $0x78] sm:$0xff]
    %v126 = vld [vmem:[%s3] sm:$0x1]
    %v128 = vlaneseq
    %v129 = vshrl.u32 %v128, 7
    %v130 = vsub.s32 0, %v129
    %v131 = vrot.slane %v126, %v130
    %133 = vmatprep.subr.mxu0 0.0
    %134 = vmatpush1.msra.mxu0 %v110
    %135 = vmatprep.subr.mxu0 0.0
    %136 = vmatpush1.msra.mxu0 %v111
    %137 = vmatprep.subr.mxu0 0.0
    %138 = vmatpush1.msra.mxu0 %v112
    %139 = vmatprep.subr.mxu0 0.0
    %140 = vmatpush1.msra.mxu0 %v113
    %141 = vmatprep.subr.mxu0 0.0
    %142 = vmatpush1.msra.mxu0 %v114
    %143 = vmatprep.subr.mxu0 0.0
    %144 = vmatpush1.msra.mxu0 %v115
    %145 = vmatprep.subr.mxu0 0.0
    %146 = vmatpush1.msra.mxu0 %v116
    %147 = vmatprep.subr.mxu0 0.0
    %148 = vmatpush1.msra.mxu0 %v117
    %149 = vmatprep.subr.mxu0 0.0
    %150 = vmatpush1.msra.mxu0 %v118
    %151 = vmatprep.subr.mxu0 0.0
    %152 = vmatpush1.msra.mxu0 %v119
    %153 = vmatprep.subr.mxu0 0.0
    %154 = vmatpush1.msra.mxu0 %v120
    %155 = vmatprep.subr.mxu0 0.0
    %156 = vmatpush1.msra.mxu0 %v121
    %157 = vmatprep.subr.mxu0 0.0
    %158 = vmatpush1.msra.mxu0 %v122
    %159 = vmatprep.subr.mxu0 0.0
    %160 = vmatpush1.msra.mxu0 %v123
    %161 = vmatprep.subr.mxu0 0.0
    %162 = vmatpush1.msra.mxu0 %v124
    %163 = vmatprep.subr.mxu0 0.0
    %164 = vmatpush1.msra.mxu0 %v125
    %165 = vmatprep.subr.mxu0 0.0
    %166 = vmatpush1.msra.mxu0 0.0
    %167 = vmatprep.subr.mxu0 0.0
    %168 = vmatpush1.msra.mxu0 0.0
    %169 = vmatprep.subr.mxu0 0.0
    %170 = vmatpush1.msra.mxu0 0.0
    %171 = vmatprep.subr.mxu0 0.0
    %172 = vmatpush1.msra.mxu0 0.0
    %173 = vmatprep.subr.mxu0 0.0
    %174 = vmatpush1.msra.mxu0 0.0
    %175 = vmatprep.subr.mxu0 0.0
    %176 = vmatpush1.msra.mxu0 0.0
    %177 = vmatprep.subr.mxu0 0.0
    %178 = vmatpush1.msra.mxu0 0.0
    %179 = vmatprep.subr.mxu0 0.0
    %180 = vmatpush1.msra.mxu0 0.0
    %181 = vmatprep.subr.mxu0 0.0
    %182 = vmatpush1.msra.mxu0 0.0
    %183 = vmatprep.subr.mxu0 0.0
    %184 = vmatpush1.msra.mxu0 0.0
    %185 = vmatprep.subr.mxu0 0.0
    %186 = vmatpush1.msra.mxu0 0.0
    %187 = vmatprep.subr.mxu0 0.0
    %188 = vmatpush1.msra.mxu0 0.0
    %189 = vmatprep.subr.mxu0 0.0
    %190 = vmatpush1.msra.mxu0 0.0
    %191 = vmatprep.subr.mxu0 0.0
    %192 = vmatpush1.msra.mxu0 0.0
    %193 = vmatprep.subr.mxu0 0.0
    %194 = vmatpush1.msra.mxu0 0.0
    %195 = vmatprep.subr.mxu0 0.0
    %196 = vmatpush1.msra.mxu0 0.0
    %197 = vmatprep.mubr.f32.mxu0 0.0
    %198 = vmatmul.mubr.f32.gmra.mrb[0].mxu0 %v46
    %v199 = vpop.f32.mrb[0].mxu0
    %v200 = vadd.f32 %v131, %v199
    %v201 = vpop.f32.mrb[0].mxu0
    %202 = vmatprep.mubr.f32.mxu0 0.0
    %203 = vmatmul.mubr.f32.gmra.mrb[0].mxu0 %v47
    %v204 = vpop.f32.mrb[0].mxu0
    %v205 = vadd.f32 %v131, %v204
    %v206 = vpop.f32.mrb[0].mxu0
    %207 = vmatprep.mubr.f32.mxu0 0.0
    %208 = vmatmul.mubr.f32.gmra.mrb[0].mxu0 %v48
    %v209 = vpop.f32.mrb[0].mxu0
    %v210 = vadd.f32 %v131, %v209
    %v211 = vpop.f32.mrb[0].mxu0
    %212 = vmatprep.mubr.f32.mxu0 0.0
    %213 = vmatmul.mubr.f32.gmra.mrb[0].mxu0 %v49
    %v214 = vpop.f32.mrb[0].mxu0
    %v215 = vadd.f32 %v131, %v214
    %v216 = vpop.f32.mrb[0].mxu0
    %217 = vmatprep.mubr.f32.mxu0 0.0
    %218 = vmatmul.mubr.f32.gmra.mrb[0].mxu0 %v50
    %v219 = vpop.f32.mrb[0].mxu0
    %v220 = vadd.f32 %v131, %v219
    %v221 = vpop.f32.mrb[0].mxu0
    %222 = vmatprep.mubr.f32.mxu0 0.0
    %223 = vmatmul.mubr.f32.gmra.mrb[0].mxu0 %v51
    %v224 = vpop.f32.mrb[0].mxu0
    %v225 = vadd.f32 %v131, %v224
    %v226 = vpop.f32.mrb[0].mxu0
    %227 = vmatprep.mubr.f32.mxu0 0.0
    %228 = vmatmul.mubr.f32.gmra.mrb[0].mxu0 %v52
    %v229 = vpop.f32.mrb[0].mxu0
    %v230 = vadd.f32 %v131, %v229
    %v231 = vpop.f32.mrb[0].mxu0
    %232 = vmatprep.mubr.f32.mxu0 0.0
    %233 = vmatmul.mubr.f32.gmra.mrb[0].mxu0 %v53
    %v234 = vpop.f32.mrb[0].mxu0
    %v235 = vadd.f32 %v131, %v234
    %v236 = vpop.f32.mrb[0].mxu0
    %237 = vmatprep.mubr.f32.mxu0 0.0
    %238 = vmatmul.mubr.f32.gmra.mrb[0].mxu0 %v54
    %v239 = vpop.f32.mrb[0].mxu0
    %v240 = vadd.f32 %v131, %v239
    %v241 = vpop.f32.mrb[0].mxu0
    %242 = vmatprep.mubr.f32.mxu0 0.0
    %243 = vmatmul.mubr.f32.gmra.mrb[0].mxu0 %v55
    %v244 = vpop.f32.mrb[0].mxu0
    %v245 = vadd.f32 %v131, %v244
    %v246 = vpop.f32.mrb[0].mxu0
    %247 = vmatprep.mubr.f32.mxu0 0.0
    %248 = vmatmul.mubr.f32.gmra.mrb[0].mxu0 %v56
    %v249 = vpop.f32.mrb[0].mxu0
    %v250 = vadd.f32 %v131, %v249
    %v251 = vpop.f32.mrb[0].mxu0
    %252 = vmatprep.mubr.f32.mxu0 0.0
    %253 = vmatmul.mubr.f32.gmra.mrb[0].mxu0 %v57
    %v254 = vpop.f32.mrb[0].mxu0
    %v255 = vadd.f32 %v131, %v254
    %v256 = vpop.f32.mrb[0].mxu0
    %257 = vmatprep.mubr.f32.mxu0 0.0
    %258 = vmatmul.mubr.f32.gmra.mrb[0].mxu0 %v58
    %v259 = vpop.f32.mrb[0].mxu0
    %v260 = vadd.f32 %v131, %v259
    %v261 = vpop.f32.mrb[0].mxu0
    %262 = vmatprep.mubr.f32.mxu0 0.0
    %263 = vmatmul.mubr.f32.gmra.mrb[0].mxu0 %v59
    %v264 = vpop.f32.mrb[0].mxu0
    %v265 = vadd.f32 %v131, %v264
    %v266 = vpop.f32.mrb[0].mxu0
    %267 = vmatprep.mubr.f32.mxu0 0.0
    %268 = vmatmul.mubr.f32.gmra.mrb[0].mxu0 %v60
    %v269 = vpop.f32.mrb[0].mxu0
    %v270 = vadd.f32 %v131, %v269
    %v271 = vpop.f32.mrb[0].mxu0
    %272 = vmatprep.mubr.f32.mxu0 0.0
    %273 = vmatmul.mubr.f32.gmra.mrb[0].mxu0 %v61
    %v274 = vpop.f32.mrb[0].mxu0
    %v275 = vadd.f32 %v131, %v274
    %v276 = vpop.f32.mrb[0].mxu0
    %277 = vmatprep.mubr.f32.mxu0 0.0
    %278 = vmatmul.mubr.f32.gmra.mrb[0].mxu0 %v62
    %v279 = vpop.f32.mrb[0].mxu0
    %v280 = vadd.f32 %v131, %v279
    %v281 = vpop.f32.mrb[0].mxu0
    %282 = vmatprep.mubr.f32.mxu0 0.0
    %283 = vmatmul.mubr.f32.gmra.mrb[0].mxu0 %v63
    %v284 = vpop.f32.mrb[0].mxu0
    %v285 = vadd.f32 %v131, %v284
    %v286 = vpop.f32.mrb[0].mxu0
    %287 = vmatprep.mubr.f32.mxu0 0.0
    %288 = vmatmul.mubr.f32.gmra.mrb[0].mxu0 %v64
    %v289 = vpop.f32.mrb[0].mxu0
    %v290 = vadd.f32 %v131, %v289
    %v291 = vpop.f32.mrb[0].mxu0
    %292 = vmatprep.mubr.f32.mxu0 0.0
    %293 = vmatmul.mubr.f32.gmra.mrb[0].mxu0 %v65
    %v294 = vpop.f32.mrb[0].mxu0
    %v295 = vadd.f32 %v131, %v294
    %v296 = vpop.f32.mrb[0].mxu0
    %297 = vmatprep.mubr.f32.mxu0 0.0
    %298 = vmatmul.mubr.f32.gmra.mrb[0].mxu0 %v66
    %v299 = vpop.f32.mrb[0].mxu0
    %v300 = vadd.f32 %v131, %v299
    %v301 = vpop.f32.mrb[0].mxu0
    %302 = vmatprep.mubr.f32.mxu0 0.0
    %303 = vmatmul.mubr.f32.gmra.mrb[0].mxu0 %v67
    %v304 = vpop.f32.mrb[0].mxu0
    %v305 = vadd.f32 %v131, %v304
    %v306 = vpop.f32.mrb[0].mxu0
    %307 = vmatprep.mubr.f32.mxu0 0.0
    %308 = vmatmul.mubr.f32.gmra.mrb[0].mxu0 %v68
    %v309 = vpop.f32.mrb[0].mxu0
    %v310 = vadd.f32 %v131, %v309
    %v311 = vpop.f32.mrb[0].mxu0
    %312 = vmatprep.mubr.f32.mxu0 0.0
    %313 = vmatmul.mubr.f32.gmra.mrb[0].mxu0 %v69
    %v314 = vpop.f32.mrb[0].mxu0
    %v315 = vadd.f32 %v131, %v314
    %v316 = vpop.f32.mrb[0].mxu0
    %317 = vmatprep.mubr.f32.mxu0 0.0
    %318 = vmatmul.mubr.f32.gmra.mrb[0].mxu0 %v70
    %v319 = vpop.f32.mrb[0].mxu0
    %v320 = vadd.f32 %v131, %v319
    %v321 = vpop.f32.mrb[0].mxu0
    %322 = vmatprep.mubr.f32.mxu0 0.0
    %323 = vmatmul.mubr.f32.gmra.mrb[0].mxu0 %v71
    %v324 = vpop.f32.mrb[0].mxu0
    %v325 = vadd.f32 %v131, %v324
    %v326 = vpop.f32.mrb[0].mxu0
    %327 = vmatprep.mubr.f32.mxu0 0.0
    %328 = vmatmul.mubr.f32.gmra.mrb[0].mxu0 %v72
    %v329 = vpop.f32.mrb[0].mxu0
    %v330 = vadd.f32 %v131, %v329
    %v331 = vpop.f32.mrb[0].mxu0
    %332 = vmatprep.mubr.f32.mxu0 0.0
    %333 = vmatmul.mubr.f32.gmra.mrb[0].mxu0 %v73
    %v334 = vpop.f32.mrb[0].mxu0
    %v335 = vadd.f32 %v131, %v334
    %v336 = vpop.f32.mrb[0].mxu0
    %337 = vmatprep.mubr.f32.mxu0 0.0
    %338 = vmatmul.mubr.f32.gmra.mrb[0].mxu0 %v74
    %v339 = vpop.f32.mrb[0].mxu0
    %v340 = vadd.f32 %v131, %v339
    %v341 = vpop.f32.mrb[0].mxu0
    %342 = vmatprep.mubr.f32.mxu0 0.0
    %343 = vmatmul.mubr.f32.gmra.mrb[0].mxu0 %v75
    %v344 = vpop.f32.mrb[0].mxu0
    %v345 = vadd.f32 %v131, %v344
    %v346 = vpop.f32.mrb[0].mxu0
    %347 = vmatprep.mubr.f32.mxu0 0.0
    %348 = vmatmul.mubr.f32.gmra.mrb[0].mxu0 %v76
    %v349 = vpop.f32.mrb[0].mxu0
    %v350 = vadd.f32 %v131, %v349
    %v351 = vpop.f32.mrb[0].mxu0
    %352 = vmatprep.mubr.f32.mxu0 0.0
    %353 = vmatmul.mubr.f32.gmra.mrb[0].mxu0 %v77
    %v354 = vpop.f32.mrb[0].mxu0
    %v355 = vadd.f32 %v131, %v354
    %v356 = vpop.f32.mrb[0].mxu0
    %357 = vmatprep.mubr.f32.mxu0 0.0
    %358 = vmatmul.mubr.f32.gmra.mrb[0].mxu0 %v78
    %v359 = vpop.f32.mrb[0].mxu0
    %v360 = vadd.f32 %v131, %v359
    %v361 = vpop.f32.mrb[0].mxu0
    %362 = vmatprep.mubr.f32.mxu0 0.0
    %363 = vmatmul.mubr.f32.gmra.mrb[0].mxu0 %v79
    %v364 = vpop.f32.mrb[0].mxu0
    %v365 = vadd.f32 %v131, %v364
    %v366 = vpop.f32.mrb[0].mxu0
    %367 = vmatprep.mubr.f32.mxu0 0.0
    %368 = vmatmul.mubr.f32.gmra.mrb[0].mxu0 %v80
    %v369 = vpop.f32.mrb[0].mxu0
    %v370 = vadd.f32 %v131, %v369
    %v371 = vpop.f32.mrb[0].mxu0
    %372 = vmatprep.mubr.f32.mxu0 0.0
    %373 = vmatmul.mubr.f32.gmra.mrb[0].mxu0 %v81
    %v374 = vpop.f32.mrb[0].mxu0
    %v375 = vadd.f32 %v131, %v374
    %v376 = vpop.f32.mrb[0].mxu0
    %377 = vmatprep.mubr.f32.mxu0 0.0
    %378 = vmatmul.mubr.f32.gmra.mrb[0].mxu0 %v82
    %v379 = vpop.f32.mrb[0].mxu0
    %v380 = vadd.f32 %v131, %v379
    %v381 = vpop.f32.mrb[0].mxu0
    %382 = vmatprep.mubr.f32.mxu0 0.0
    %383 = vmatmul.mubr.f32.gmra.mrb[0].mxu0 %v83
    %v384 = vpop.f32.mrb[0].mxu0
    %v385 = vadd.f32 %v131, %v384
    %v386 = vpop.f32.mrb[0].mxu0
    %387 = vmatprep.mubr.f32.mxu0 0.0
    %388 = vmatmul.mubr.f32.gmra.mrb[0].mxu0 %v84
    %v389 = vpop.f32.mrb[0].mxu0
    %v390 = vadd.f32 %v131, %v389
    %v391 = vpop.f32.mrb[0].mxu0
    %392 = vmatprep.mubr.f32.mxu0 0.0
    %393 = vmatmul.mubr.f32.gmra.mrb[0].mxu0 %v85
    %v394 = vpop.f32.mrb[0].mxu0
    %v395 = vadd.f32 %v131, %v394
    %v396 = vpop.f32.mrb[0].mxu0
    %397 = vmatprep.mubr.f32.mxu0 0.0
    %398 = vmatmul.mubr.f32.gmra.mrb[0].mxu0 %v86
    %v399 = vpop.f32.mrb[0].mxu0
    %v400 = vadd.f32 %v131, %v399
    %v401 = vpop.f32.mrb[0].mxu0
    %402 = vmatprep.mubr.f32.mxu0 0.0
    %403 = vmatmul.mubr.f32.gmra.mrb[0].mxu0 %v87
    %v404 = vpop.f32.mrb[0].mxu0
    %v405 = vadd.f32 %v131, %v404
    %v406 = vpop.f32.mrb[0].mxu0
    %407 = vmatprep.mubr.f32.mxu0 0.0
    %408 = vmatmul.mubr.f32.gmra.mrb[0].mxu0 %v88
    %v409 = vpop.f32.mrb[0].mxu0
    %v410 = vadd.f32 %v131, %v409
    %v411 = vpop.f32.mrb[0].mxu0
    %412 = vmatprep.mubr.f32.mxu0 0.0
    %413 = vmatmul.mubr.f32.gmra.mrb[0].mxu0 %v89
    %v414 = vpop.f32.mrb[0].mxu0
    %v415 = vadd.f32 %v131, %v414
    %v416 = vpop.f32.mrb[0].mxu0
    %417 = vmatprep.mubr.f32.mxu0 0.0
    %418 = vmatmul.mubr.f32.gmra.mrb[0].mxu0 %v90
    %v419 = vpop.f32.mrb[0].mxu0
    %v420 = vadd.f32 %v131, %v419
    %v421 = vpop.f32.mrb[0].mxu0
    %422 = vmatprep.mubr.f32.mxu0 0.0
    %423 = vmatmul.mubr.f32.gmra.mrb[0].mxu0 %v91
    %v424 = vpop.f32.mrb[0].mxu0
    %v425 = vadd.f32 %v131, %v424
    %v426 = vpop.f32.mrb[0].mxu0
    %427 = vmatprep.mubr.f32.mxu0 0.0
    %428 = vmatmul.mubr.f32.gmra.mrb[0].mxu0 %v92
    %v429 = vpop.f32.mrb[0].mxu0
    %v430 = vadd.f32 %v131, %v429
    %v431 = vpop.f32.mrb[0].mxu0
    %432 = vmatprep.mubr.f32.mxu0 0.0
    %433 = vmatmul.mubr.f32.gmra.mrb[0].mxu0 %v93
    %v434 = vpop.f32.mrb[0].mxu0
    %v435 = vadd.f32 %v131, %v434
    %v436 = vpop.f32.mrb[0].mxu0
    %437 = vmatprep.mubr.f32.mxu0 0.0
    %438 = vmatmul.mubr.f32.gmra.mrb[0].mxu0 %v94
    %v439 = vpop.f32.mrb[0].mxu0
    %v440 = vadd.f32 %v131, %v439
    %v441 = vpop.f32.mrb[0].mxu0
    %442 = vmatprep.mubr.f32.mxu0 0.0
    %443 = vmatmul.mubr.f32.gmra.mrb[0].mxu0 %v95
    %v444 = vpop.f32.mrb[0].mxu0
    %v445 = vadd.f32 %v131, %v444
    %v446 = vpop.f32.mrb[0].mxu0
    %447 = vmatprep.mubr.f32.mxu0 0.0
    %448 = vmatmul.mubr.f32.gmra.mrb[0].mxu0 %v96
    %v449 = vpop.f32.mrb[0].mxu0
    %v450 = vadd.f32 %v131, %v449
    %v451 = vpop.f32.mrb[0].mxu0
    %452 = vmatprep.mubr.f32.mxu0 0.0
    %453 = vmatmul.mubr.f32.gmra.mrb[0].mxu0 %v97
    %v454 = vpop.f32.mrb[0].mxu0
    %v455 = vadd.f32 %v131, %v454
    %v456 = vpop.f32.mrb[0].mxu0
    %457 = vmatprep.mubr.f32.mxu0 0.0
    %458 = vmatmul.mubr.f32.gmra.mrb[0].mxu0 %v98
    %v459 = vpop.f32.mrb[0].mxu0
    %v460 = vadd.f32 %v131, %v459
    %v461 = vpop.f32.mrb[0].mxu0
    %462 = vmatprep.mubr.f32.mxu0 0.0
    %463 = vmatmul.mubr.f32.gmra.mrb[0].mxu0 %v99
    %v464 = vpop.f32.mrb[0].mxu0
    %v465 = vadd.f32 %v131, %v464
    %v466 = vpop.f32.mrb[0].mxu0
    %467 = vmatprep.mubr.f32.mxu0 0.0
    %468 = vmatmul.mubr.f32.gmra.mrb[0].mxu0 %v100
    %v469 = vpop.f32.mrb[0].mxu0
    %v470 = vadd.f32 %v131, %v469
    %v471 = vpop.f32.mrb[0].mxu0
    %472 = vmatprep.mubr.f32.mxu0 0.0
    %473 = vmatmul.mubr.f32.gmra.mrb[0].mxu0 %v101
    %v474 = vpop.f32.mrb[0].mxu0
    %v475 = vadd.f32 %v131, %v474
    %v476 = vpop.f32.mrb[0].mxu0
    %477 = vmatprep.mubr.f32.mxu0 0.0
    %478 = vmatmul.mubr.f32.gmra.mrb[0].mxu0 %v102
    %v479 = vpop.f32.mrb[0].mxu0
    %v480 = vadd.f32 %v131, %v479
    %v481 = vpop.f32.mrb[0].mxu0
    %482 = vmatprep.mubr.f32.mxu0 0.0
    %483 = vmatmul.mubr.f32.gmra.mrb[0].mxu0 %v103
    %v484 = vpop.f32.mrb[0].mxu0
    %v485 = vadd.f32 %v131, %v484
    %v486 = vpop.f32.mrb[0].mxu0
    %487 = vmatprep.mubr.f32.mxu0 0.0
    %488 = vmatmul.mubr.f32.gmra.mrb[0].mxu0 %v104
    %v489 = vpop.f32.mrb[0].mxu0
    %v490 = vadd.f32 %v131, %v489
    %v491 = vpop.f32.mrb[0].mxu0
    %492 = vmatprep.mubr.f32.mxu0 0.0
    %493 = vmatmul.mubr.f32.gmra.mrb[0].mxu0 %v105
    %v494 = vpop.f32.mrb[0].mxu0
    %v495 = vadd.f32 %v131, %v494
    %v496 = vpop.f32.mrb[0].mxu0
    %497 = vmatprep.mubr.f32.mxu0 0.0
    %498 = vmatmul.mubr.f32.gmra.mrb[0].mxu0 %v106
    %v499 = vpop.f32.mrb[0].mxu0
    %v500 = vadd.f32 %v131, %v499
    %v501 = vpop.f32.mrb[0].mxu0
    %502 = vmatprep.mubr.f32.mxu0 0.0
    %503 = vmatmul.mubr.f32.gmra.mrb[0].mxu0 %v107
    %v504 = vpop.f32.mrb[0].mxu0
    %v505 = vadd.f32 %v131, %v504
    %v506 = vpop.f32.mrb[0].mxu0
    %507 = vmatprep.mubr.f32.mxu0 0.0
    %508 = vmatmul.mubr.f32.gmra.mrb[0].mxu0 %v108
    %v509 = vpop.f32.mrb[0].mxu0
    %v510 = vadd.f32 %v131, %v509
    %v511 = vpop.f32.mrb[0].mxu0
    %512 = vmatprep.mubr.f32.mxu0 0.0
    %513 = vmatmul.mubr.f32.gmra.mrb[0].mxu0 %v109
    %v514 = vpop.f32.mrb[0].mxu0
    %v515 = vadd.f32 %v131, %v514
    %v516 = vpop.f32.mrb[0].mxu0
    %517 = vdwg.mxu0
    %v518 = vtanh.pop %v200
    %v519 = vtanh.pop %v205
    %v520 = vtanh.pop %v210
    %v521 = vtanh.pop %v215
    %v522 = vtanh.pop %v220
    %v523 = vtanh.pop %v225
    %v524 = vtanh.pop %v230
    %v525 = vtanh.pop %v235
    %v526 = vtanh.pop %v240
    %v527 = vtanh.pop %v245
    %v528 = vtanh.pop %v250
    %v529 = vtanh.pop %v255
    %v530 = vtanh.pop %v260
    %v531 = vtanh.pop %v265
    %v532 = vtanh.pop %v270
    %v533 = vtanh.pop %v275
    %v534 = vtanh.pop %v280
    %v535 = vtanh.pop %v285
    %v536 = vtanh.pop %v290
    %v537 = vtanh.pop %v295
    %v538 = vtanh.pop %v300
    %v539 = vtanh.pop %v305
    %v540 = vtanh.pop %v310
    %v541 = vtanh.pop %v315
    %v542 = vtanh.pop %v320
    %v543 = vtanh.pop %v325
    %v544 = vtanh.pop %v330
    %v545 = vtanh.pop %v335
    %v546 = vtanh.pop %v340
    %v547 = vtanh.pop %v345
    %v548 = vtanh.pop %v350
    %v549 = vtanh.pop %v355
    %v550 = vtanh.pop %v360
    %v551 = vtanh.pop %v365
    %v552 = vtanh.pop %v370
    %v553 = vtanh.pop %v375
    %v554 = vtanh.pop %v380
    %v555 = vtanh.pop %v385
    %v556 = vtanh.pop %v390
    %v557 = vtanh.pop %v395
    %v558 = vtanh.pop %v400
    %v559 = vtanh.pop %v405
    %v560 = vtanh.pop %v410
    %v561 = vtanh.pop %v415
    %v562 = vtanh.pop %v420
    %v563 = vtanh.pop %v425
    %v564 = vtanh.pop %v430
    %v565 = vtanh.pop %v435
    %v566 = vtanh.pop %v440
    %v567 = vtanh.pop %v445
    %v568 = vtanh.pop %v450
    %v569 = vtanh.pop %v455
    %v570 = vtanh.pop %v460
    %v571 = vtanh.pop %v465
    %v572 = vtanh.pop %v470
    %v573 = vtanh.pop %v475
    %v574 = vtanh.pop %v480
    %v575 = vtanh.pop %v485
    %v576 = vtanh.pop %v490
    %v577 = vtanh.pop %v495
    %v578 = vtanh.pop %v500
    %v579 = vtanh.pop %v505
    %v580 = vtanh.pop %v510
    %v581 = vtanh.pop %v515
    %v582 = vmul.f32 %v46, 0.088388346
    %v583 = vmul.f32 %v47, 0.088388346
    %v584 = vmul.f32 %v48, 0.088388346
    %v585 = vmul.f32 %v49, 0.088388346
    %v586 = vmul.f32 %v50, 0.088388346
    %v587 = vmul.f32 %v51, 0.088388346
    %v588 = vmul.f32 %v52, 0.088388346
    %v589 = vmul.f32 %v53, 0.088388346
    %v590 = vmul.f32 %v54, 0.088388346
    %v591 = vmul.f32 %v55, 0.088388346
    %v592 = vmul.f32 %v56, 0.088388346
    %v593 = vmul.f32 %v57, 0.088388346
    %v594 = vmul.f32 %v58, 0.088388346
    %v595 = vmul.f32 %v59, 0.088388346
    %v596 = vmul.f32 %v60, 0.088388346
    %v597 = vmul.f32 %v61, 0.088388346
    %v598 = vmul.f32 %v62, 0.088388346
    %v599 = vmul.f32 %v63, 0.088388346
    %v600 = vmul.f32 %v64, 0.088388346
    %v601 = vmul.f32 %v65, 0.088388346
    %v602 = vmul.f32 %v66, 0.088388346
    %v603 = vmul.f32 %v67, 0.088388346
    %v604 = vmul.f32 %v68, 0.088388346
    %v605 = vmul.f32 %v69, 0.088388346
    %v606 = vmul.f32 %v70, 0.088388346
    %v607 = vmul.f32 %v71, 0.088388346
    %v608 = vmul.f32 %v72, 0.088388346
    %v609 = vmul.f32 %v73, 0.088388346
    %v610 = vmul.f32 %v74, 0.088388346
    %v611 = vmul.f32 %v75, 0.088388346
    %v612 = vmul.f32 %v76, 0.088388346
    %v613 = vmul.f32 %v77, 0.088388346
    %v614 = vmul.f32 %v78, 0.088388346
    %v615 = vmul.f32 %v79, 0.088388346
    %v616 = vmul.f32 %v80, 0.088388346
    %v617 = vmul.f32 %v81, 0.088388346
    %v618 = vmul.f32 %v82, 0.088388346
    %v619 = vmul.f32 %v83, 0.088388346
    %v620 = vmul.f32 %v84, 0.088388346
    %v621 = vmul.f32 %v85, 0.088388346
    %v622 = vmul.f32 %v86, 0.088388346
    %v623 = vmul.f32 %v87, 0.088388346
    %v624 = vmul.f32 %v88, 0.088388346
    %v625 = vmul.f32 %v89, 0.088388346
    %v626 = vmul.f32 %v90, 0.088388346
    %v627 = vmul.f32 %v91, 0.088388346
    %v628 = vmul.f32 %v92, 0.088388346
    %v629 = vmul.f32 %v93, 0.088388346
    %v630 = vmul.f32 %v94, 0.088388346
    %v631 = vmul.f32 %v95, 0.088388346
    %v632 = vmul.f32 %v96, 0.088388346
    %v633 = vmul.f32 %v97, 0.088388346
    %v634 = vmul.f32 %v98, 0.088388346
    %v635 = vmul.f32 %v99, 0.088388346
    %v636 = vmul.f32 %v100, 0.088388346
    %v637 = vmul.f32 %v101, 0.088388346
    %v638 = vmul.f32 %v102, 0.088388346
    %v639 = vmul.f32 %v103, 0.088388346
    %v640 = vmul.f32 %v104, 0.088388346
    %v641 = vmul.f32 %v105, 0.088388346
    %v642 = vmul.f32 %v106, 0.088388346
    %v643 = vmul.f32 %v107, 0.088388346
    %v644 = vmul.f32 %v108, 0.088388346
    %v645 = vmul.f32 %v109, 0.088388346
    %v646 = vlaneseq
    %v647 = vshrl.u32 %v646, 7
    %v648 = vsub.s32 1, %v647
    %v649 = vrot.slane %v582, %v648
    %v650 = vlaneseq
    %v651 = vshrl.u32 %v650, 7
    %v652 = vsub.s32 1, %v651
    %v653 = vrot.slane %v583, %v652
    %v654 = vlaneseq
    %v655 = vshrl.u32 %v654, 7
    %v656 = vsub.s32 1, %v655
    %v657 = vrot.slane %v584, %v656
    %v658 = vlaneseq
    %v659 = vshrl.u32 %v658, 7
    %v660 = vsub.s32 1, %v659
    %v661 = vrot.slane %v585, %v660
    %v662 = vlaneseq
    %v663 = vshrl.u32 %v662, 7
    %v664 = vsub.s32 1, %v663
    %v665 = vrot.slane %v586, %v664
    %v666 = vlaneseq
    %v667 = vshrl.u32 %v666, 7
    %v668 = vsub.s32 1, %v667
    %v669 = vrot.slane %v587, %v668
    %v670 = vlaneseq
    %v671 = vshrl.u32 %v670, 7
    %v672 = vsub.s32 1, %v671
    %v673 = vrot.slane %v588, %v672
    %v674 = vlaneseq
    %v675 = vshrl.u32 %v674, 7
    %v676 = vsub.s32 1, %v675
    %v677 = vrot.slane %v589, %v676
    %v678 = vlaneseq
    %v679 = vshrl.u32 %v678, 7
    %v680 = vsub.s32 1, %v679
    %v681 = vrot.slane %v590, %v680
    %v682 = vlaneseq
    %v683 = vshrl.u32 %v682, 7
    %v684 = vsub.s32 1, %v683
    %v685 = vrot.slane %v591, %v684
    %v686 = vlaneseq
    %v687 = vshrl.u32 %v686, 7
    %v688 = vsub.s32 1, %v687
    %v689 = vrot.slane %v592, %v688
    %v690 = vlaneseq
    %v691 = vshrl.u32 %v690, 7
    %v692 = vsub.s32 1, %v691
    %v693 = vrot.slane %v593, %v692
    %v694 = vlaneseq
    %v695 = vshrl.u32 %v694, 7
    %v696 = vsub.s32 1, %v695
    %v697 = vrot.slane %v594, %v696
    %v698 = vlaneseq
    %v699 = vshrl.u32 %v698, 7
    %v700 = vsub.s32 1, %v699
    %v701 = vrot.slane %v595, %v700
    %v702 = vlaneseq
    %v703 = vshrl.u32 %v702, 7
    %v704 = vsub.s32 1, %v703
    %v705 = vrot.slane %v596, %v704
    %v706 = vlaneseq
    %v707 = vshrl.u32 %v706, 7
    %v708 = vsub.s32 1, %v707
    %v709 = vrot.slane %v597, %v708
    %v710 = vlaneseq
    %v711 = vshrl.u32 %v710, 7
    %v712 = vsub.s32 1, %v711
    %v713 = vrot.slane %v598, %v712
    %v714 = vlaneseq
    %v715 = vshrl.u32 %v714, 7
    %v716 = vsub.s32 1, %v715
    %v717 = vrot.slane %v599, %v716
    %v718 = vlaneseq
    %v719 = vshrl.u32 %v718, 7
    %v720 = vsub.s32 1, %v719
    %v721 = vrot.slane %v600, %v720
    %v722 = vlaneseq
    %v723 = vshrl.u32 %v722, 7
    %v724 = vsub.s32 1, %v723
    %v725 = vrot.slane %v601, %v724
    %v726 = vlaneseq
    %v727 = vshrl.u32 %v726, 7
    %v728 = vsub.s32 1, %v727
    %v729 = vrot.slane %v602, %v728
    %v730 = vlaneseq
    %v731 = vshrl.u32 %v730, 7
    %v732 = vsub.s32 1, %v731
    %v733 = vrot.slane %v603, %v732
    %v734 = vlaneseq
    %v735 = vshrl.u32 %v734, 7
    %v736 = vsub.s32 1, %v735
    %v737 = vrot.slane %v604, %v736
    %v738 = vlaneseq
    %v739 = vshrl.u32 %v738, 7
    %v740 = vsub.s32 1, %v739
    %v741 = vrot.slane %v605, %v740
    %v742 = vlaneseq
    %v743 = vshrl.u32 %v742, 7
    %v744 = vsub.s32 1, %v743
    %v745 = vrot.slane %v606, %v744
    %v746 = vlaneseq
    %v747 = vshrl.u32 %v746, 7
    %v748 = vsub.s32 1, %v747
    %v749 = vrot.slane %v607, %v748
    %v750 = vlaneseq
    %v751 = vshrl.u32 %v750, 7
    %v752 = vsub.s32 1, %v751
    %v753 = vrot.slane %v608, %v752
    %v754 = vlaneseq
    %v755 = vshrl.u32 %v754, 7
    %v756 = vsub.s32 1, %v755
    %v757 = vrot.slane %v609, %v756
    %v758 = vlaneseq
    %v759 = vshrl.u32 %v758, 7
    %v760 = vsub.s32 1, %v759
    %v761 = vrot.slane %v610, %v760
    %v762 = vlaneseq
    %v763 = vshrl.u32 %v762, 7
    %v764 = vsub.s32 1, %v763
    %v765 = vrot.slane %v611, %v764
    %v766 = vlaneseq
    %v767 = vshrl.u32 %v766, 7
    %v768 = vsub.s32 1, %v767
    %v769 = vrot.slane %v612, %v768
    %v770 = vlaneseq
    %v771 = vshrl.u32 %v770, 7
    %v772 = vsub.s32 1, %v771
    %v773 = vrot.slane %v613, %v772
    %v774 = vlaneseq
    %v775 = vshrl.u32 %v774, 7
    %v776 = vsub.s32 1, %v775
    %v777 = vrot.slane %v614, %v776
    %v778 = vlaneseq
    %v779 = vshrl.u32 %v778, 7
    %v780 = vsub.s32 1, %v779
    %v781 = vrot.slane %v615, %v780
    %v782 = vlaneseq
    %v783 = vshrl.u32 %v782, 7
    %v784 = vsub.s32 1, %v783
    %v785 = vrot.slane %v616, %v784
    %v786 = vlaneseq
    %v787 = vshrl.u32 %v786, 7
    %v788 = vsub.s32 1, %v787
    %v789 = vrot.slane %v617, %v788
    %v790 = vlaneseq
    %v791 = vshrl.u32 %v790, 7
    %v792 = vsub.s32 1, %v791
    %v793 = vrot.slane %v618, %v792
    %v794 = vlaneseq
    %v795 = vshrl.u32 %v794, 7
    %v796 = vsub.s32 1, %v795
    %v797 = vrot.slane %v619, %v796
    %v798 = vlaneseq
    %v799 = vshrl.u32 %v798, 7
    %v800 = vsub.s32 1, %v799
    %v801 = vrot.slane %v620, %v800
    %v802 = vlaneseq
    %v803 = vshrl.u32 %v802, 7
    %v804 = vsub.s32 1, %v803
    %v805 = vrot.slane %v621, %v804
    %v806 = vlaneseq
    %v807 = vshrl.u32 %v806, 7
    %v808 = vsub.s32 1, %v807
    %v809 = vrot.slane %v622, %v808
    %v810 = vlaneseq
    %v811 = vshrl.u32 %v810, 7
    %v812 = vsub.s32 1, %v811
    %v813 = vrot.slane %v623, %v812
    %v814 = vlaneseq
    %v815 = vshrl.u32 %v814, 7
    %v816 = vsub.s32 1, %v815
    %v817 = vrot.slane %v624, %v816
    %v818 = vlaneseq
    %v819 = vshrl.u32 %v818, 7
    %v820 = vsub.s32 1, %v819
    %v821 = vrot.slane %v625, %v820
    %v822 = vlaneseq
    %v823 = vshrl.u32 %v822, 7
    %v824 = vsub.s32 1, %v823
    %v825 = vrot.slane %v626, %v824
    %v826 = vlaneseq
    %v827 = vshrl.u32 %v826, 7
    %v828 = vsub.s32 1, %v827
    %v829 = vrot.slane %v627, %v828
    %v830 = vlaneseq
    %v831 = vshrl.u32 %v830, 7
    %v832 = vsub.s32 1, %v831
    %v833 = vrot.slane %v628, %v832
    %v834 = vlaneseq
    %v835 = vshrl.u32 %v834, 7
    %v836 = vsub.s32 1, %v835
    %v837 = vrot.slane %v629, %v836
    %v838 = vlaneseq
    %v839 = vshrl.u32 %v838, 7
    %v840 = vsub.s32 1, %v839
    %v841 = vrot.slane %v630, %v840
    %v842 = vlaneseq
    %v843 = vshrl.u32 %v842, 7
    %v844 = vsub.s32 1, %v843
    %v845 = vrot.slane %v631, %v844
    %v846 = vlaneseq
    %v847 = vshrl.u32 %v846, 7
    %v848 = vsub.s32 1, %v847
    %v849 = vrot.slane %v632, %v848
    %v850 = vlaneseq
    %v851 = vshrl.u32 %v850, 7
    %v852 = vsub.s32 1, %v851
    %v853 = vrot.slane %v633, %v852
    %v854 = vlaneseq
    %v855 = vshrl.u32 %v854, 7
    %v856 = vsub.s32 1, %v855
    %v857 = vrot.slane %v634, %v856
    %v858 = vlaneseq
    %v859 = vshrl.u32 %v858, 7
    %v860 = vsub.s32 1, %v859
    %v861 = vrot.slane %v635, %v860
    %v862 = vlaneseq
    %v863 = vshrl.u32 %v862, 7
    %v864 = vsub.s32 1, %v863
    %v865 = vrot.slane %v636, %v864
    %v866 = vlaneseq
    %v867 = vshrl.u32 %v866, 7
    %v868 = vsub.s32 1, %v867
    %v869 = vrot.slane %v637, %v868
    %v870 = vlaneseq
    %v871 = vshrl.u32 %v870, 7
    %v872 = vsub.s32 1, %v871
    %v873 = vrot.slane %v638, %v872
    %v874 = vlaneseq
    %v875 = vshrl.u32 %v874, 7
    %v876 = vsub.s32 1, %v875
    %v877 = vrot.slane %v639, %v876
    %v878 = vlaneseq
    %v879 = vshrl.u32 %v878, 7
    %v880 = vsub.s32 1, %v879
    %v881 = vrot.slane %v640, %v880
    %v882 = vlaneseq
    %v883 = vshrl.u32 %v882, 7
    %v884 = vsub.s32 1, %v883
    %v885 = vrot.slane %v641, %v884
    %v886 = vlaneseq
    %v887 = vshrl.u32 %v886, 7
    %v888 = vsub.s32 1, %v887
    %v889 = vrot.slane %v642, %v888
    %v890 = vlaneseq
    %v891 = vshrl.u32 %v890, 7
    %v892 = vsub.s32 1, %v891
    %v893 = vrot.slane %v643, %v892
    %v894 = vlaneseq
    %v895 = vshrl.u32 %v894, 7
    %v896 = vsub.s32 1, %v895
    %v897 = vrot.slane %v644, %v896
    %v898 = vlaneseq
    %v899 = vshrl.u32 %v898, 7
    %v900 = vsub.s32 1, %v899
    %v901 = vrot.slane %v645, %v900
    %v902 = vmul.f32 %v518, %v649
    %v903 = vmul.f32 %v519, %v653
    %v904 = vmul.f32 %v520, %v657
    %v905 = vmul.f32 %v521, %v661
    %v906 = vmul.f32 %v522, %v665
    %v907 = vmul.f32 %v523, %v669
    %v908 = vmul.f32 %v524, %v673
    %v909 = vmul.f32 %v525, %v677
    %v910 = vmul.f32 %v526, %v681
    %v911 = vmul.f32 %v527, %v685
    %v912 = vmul.f32 %v528, %v689
    %v913 = vmul.f32 %v529, %v693
    %v914 = vmul.f32 %v530, %v697
    %v915 = vmul.f32 %v531, %v701
    %v916 = vmul.f32 %v532, %v705
    %v917 = vmul.f32 %v533, %v709
    %v918 = vmul.f32 %v534, %v713
    %v919 = vmul.f32 %v535, %v717
    %v920 = vmul.f32 %v536, %v721
    %v921 = vmul.f32 %v537, %v725
    %v922 = vmul.f32 %v538, %v729
    %v923 = vmul.f32 %v539, %v733
    %v924 = vmul.f32 %v540, %v737
    %v925 = vmul.f32 %v541, %v741
    %v926 = vmul.f32 %v542, %v745
    %v927 = vmul.f32 %v543, %v749
    %v928 = vmul.f32 %v544, %v753
    %v929 = vmul.f32 %v545, %v757
    %v930 = vmul.f32 %v546, %v761
    %v931 = vmul.f32 %v547, %v765
    %v932 = vmul.f32 %v548, %v769
    %v933 = vmul.f32 %v549, %v773
    %v934 = vmul.f32 %v550, %v777
    %v935 = vmul.f32 %v551, %v781
    %v936 = vmul.f32 %v552, %v785
    %v937 = vmul.f32 %v553, %v789
    %v938 = vmul.f32 %v554, %v793
    %v939 = vmul.f32 %v555, %v797
    %v940 = vmul.f32 %v556, %v801
    %v941 = vmul.f32 %v557, %v805
    %v942 = vmul.f32 %v558, %v809
    %v943 = vmul.f32 %v559, %v813
    %v944 = vmul.f32 %v560, %v817
    %v945 = vmul.f32 %v561, %v821
    %v946 = vmul.f32 %v562, %v825
    %v947 = vmul.f32 %v563, %v829
    %v948 = vmul.f32 %v564, %v833
    %v949 = vmul.f32 %v565, %v837
    %v950 = vmul.f32 %v566, %v841
    %v951 = vmul.f32 %v567, %v845
    %v952 = vmul.f32 %v568, %v849
    %v953 = vmul.f32 %v569, %v853
    %v954 = vmul.f32 %v570, %v857
    %v955 = vmul.f32 %v571, %v861
    %v956 = vmul.f32 %v572, %v865
    %v957 = vmul.f32 %v573, %v869
    %v958 = vmul.f32 %v574, %v873
    %v959 = vmul.f32 %v575, %v877
    %v960 = vmul.f32 %v576, %v881
    %v961 = vmul.f32 %v577, %v885
    %v962 = vmul.f32 %v578, %v889
    %v963 = vmul.f32 %v579, %v893
    %v964 = vmul.f32 %v580, %v897
    %v965 = vmul.f32 %v581, %v901
    %966 = vadd.xlane.f32.xlu0 %v902
    %v967 = vpop.xlane.xlu0 %966
    %968 = vadd.xlane.f32.xlu0 %v903
    %v969 = vpop.xlane.xlu0 %968
    %970 = vadd.xlane.f32.xlu0 %v904
    %v971 = vpop.xlane.xlu0 %970
    %972 = vadd.xlane.f32.xlu0 %v905
    %v973 = vpop.xlane.xlu0 %972
    %974 = vadd.xlane.f32.xlu0 %v906
    %v975 = vpop.xlane.xlu0 %974
    %976 = vadd.xlane.f32.xlu0 %v907
    %v977 = vpop.xlane.xlu0 %976
    %978 = vadd.xlane.f32.xlu0 %v908
    %v979 = vpop.xlane.xlu0 %978
    %980 = vadd.xlane.f32.xlu0 %v909
    %v981 = vpop.xlane.xlu0 %980
    %982 = vadd.xlane.f32.xlu0 %v910
    %v983 = vpop.xlane.xlu0 %982
    %984 = vadd.xlane.f32.xlu0 %v911
    %v985 = vpop.xlane.xlu0 %984
    %986 = vadd.xlane.f32.xlu0 %v912
    %v987 = vpop.xlane.xlu0 %986
    %988 = vadd.xlane.f32.xlu0 %v913
    %v989 = vpop.xlane.xlu0 %988
    %990 = vadd.xlane.f32.xlu0 %v914
    %v991 = vpop.xlane.xlu0 %990
    %992 = vadd.xlane.f32.xlu0 %v915
    %v993 = vpop.xlane.xlu0 %992
    %994 = vadd.xlane.f32.xlu0 %v916
    %v995 = vpop.xlane.xlu0 %994
    %996 = vadd.xlane.f32.xlu0 %v917
    %v997 = vpop.xlane.xlu0 %996
    %998 = vadd.xlane.f32.xlu0 %v918
    %v999 = vpop.xlane.xlu0 %998
    %1000 = vadd.xlane.f32.xlu0 %v919
    %v1001 = vpop.xlane.xlu0 %1000
    %1002 = vadd.xlane.f32.xlu0 %v920
    %v1003 = vpop.xlane.xlu0 %1002
    %1004 = vadd.xlane.f32.xlu0 %v921
    %v1005 = vpop.xlane.xlu0 %1004
    %1006 = vadd.xlane.f32.xlu0 %v922
    %v1007 = vpop.xlane.xlu0 %1006
    %1008 = vadd.xlane.f32.xlu0 %v923
    %v1009 = vpop.xlane.xlu0 %1008
    %1010 = vadd.xlane.f32.xlu0 %v924
    %v1011 = vpop.xlane.xlu0 %1010
    %1012 = vadd.xlane.f32.xlu0 %v925
    %v1013 = vpop.xlane.xlu0 %1012
    %1014 = vadd.xlane.f32.xlu0 %v926
    %v1015 = vpop.xlane.xlu0 %1014
    %1016 = vadd.xlane.f32.xlu0 %v927
    %v1017 = vpop.xlane.xlu0 %1016
    %1018 = vadd.xlane.f32.xlu0 %v928
    %v1019 = vpop.xlane.xlu0 %1018
    %1020 = vadd.xlane.f32.xlu0 %v929
    %v1021 = vpop.xlane.xlu0 %1020
    %1022 = vadd.xlane.f32.xlu0 %v930
    %v1023 = vpop.xlane.xlu0 %1022
    %1024 = vadd.xlane.f32.xlu0 %v931
    %v1025 = vpop.xlane.xlu0 %1024
    %1026 = vadd.xlane.f32.xlu0 %v932
    %v1027 = vpop.xlane.xlu0 %1026
    %1028 = vadd.xlane.f32.xlu0 %v933
    %v1029 = vpop.xlane.xlu0 %1028
    %1030 = vadd.xlane.f32.xlu0 %v934
    %v1031 = vpop.xlane.xlu0 %1030
    %1032 = vadd.xlane.f32.xlu0 %v935
    %v1033 = vpop.xlane.xlu0 %1032
    %1034 = vadd.xlane.f32.xlu0 %v936
    %v1035 = vpop.xlane.xlu0 %1034
    %1036 = vadd.xlane.f32.xlu0 %v937
    %v1037 = vpop.xlane.xlu0 %1036
    %1038 = vadd.xlane.f32.xlu0 %v938
    %v1039 = vpop.xlane.xlu0 %1038
    %1040 = vadd.xlane.f32.xlu0 %v939
    %v1041 = vpop.xlane.xlu0 %1040
    %1042 = vadd.xlane.f32.xlu0 %v940
    %v1043 = vpop.xlane.xlu0 %1042
    %1044 = vadd.xlane.f32.xlu0 %v941
    %v1045 = vpop.xlane.xlu0 %1044
    %1046 = vadd.xlane.f32.xlu0 %v942
    %v1047 = vpop.xlane.xlu0 %1046
    %1048 = vadd.xlane.f32.xlu0 %v943
    %v1049 = vpop.xlane.xlu0 %1048
    %1050 = vadd.xlane.f32.xlu0 %v944
    %v1051 = vpop.xlane.xlu0 %1050
    %1052 = vadd.xlane.f32.xlu0 %v945
    %v1053 = vpop.xlane.xlu0 %1052
    %1054 = vadd.xlane.f32.xlu0 %v946
    %v1055 = vpop.xlane.xlu0 %1054
    %1056 = vadd.xlane.f32.xlu0 %v947
    %v1057 = vpop.xlane.xlu0 %1056
    %1058 = vadd.xlane.f32.xlu0 %v948
    %v1059 = vpop.xlane.xlu0 %1058
    %1060 = vadd.xlane.f32.xlu0 %v949
    %v1061 = vpop.xlane.xlu0 %1060
    %1062 = vadd.xlane.f32.xlu0 %v950
    %v1063 = vpop.xlane.xlu0 %1062
    %1064 = vadd.xlane.f32.xlu0 %v951
    %v1065 = vpop.xlane.xlu0 %1064
    %1066 = vadd.xlane.f32.xlu0 %v952
    %v1067 = vpop.xlane.xlu0 %1066
    %1068 = vadd.xlane.f32.xlu0 %v953
    %v1069 = vpop.xlane.xlu0 %1068
    %1070 = vadd.xlane.f32.xlu0 %v954
    %v1071 = vpop.xlane.xlu0 %1070
    %1072 = vadd.xlane.f32.xlu0 %v955
    %v1073 = vpop.xlane.xlu0 %1072
    %1074 = vadd.xlane.f32.xlu0 %v956
    %v1075 = vpop.xlane.xlu0 %1074
    %1076 = vadd.xlane.f32.xlu0 %v957
    %v1077 = vpop.xlane.xlu0 %1076
    %1078 = vadd.xlane.f32.xlu0 %v958
    %v1079 = vpop.xlane.xlu0 %1078
    %1080 = vadd.xlane.f32.xlu0 %v959
    %v1081 = vpop.xlane.xlu0 %1080
    %1082 = vadd.xlane.f32.xlu0 %v960
    %v1083 = vpop.xlane.xlu0 %1082
    %1084 = vadd.xlane.f32.xlu0 %v961
    %v1085 = vpop.xlane.xlu0 %1084
    %1086 = vadd.xlane.f32.xlu0 %v962
    %v1087 = vpop.xlane.xlu0 %1086
    %1088 = vadd.xlane.f32.xlu0 %v963
    %v1089 = vpop.xlane.xlu0 %1088
    %1090 = vadd.xlane.f32.xlu0 %v964
    %v1091 = vpop.xlane.xlu0 %1090
    %1092 = vadd.xlane.f32.xlu0 %v965
    %v1093 = vpop.xlane.xlu0 %1092
    %v1094 = vld [vmem:[%s1] sm:$0xff]
    %v1095 = vld [vmem:[%s1 + $0x8] sm:$0xff]
    %v1096 = vld [vmem:[%s1 + $0x10] sm:$0xff]
    %v1097 = vld [vmem:[%s1 + $0x18] sm:$0xff]
    %v1098 = vld [vmem:[%s1 + $0x20] sm:$0xff]
    %v1099 = vld [vmem:[%s1 + $0x28] sm:$0xff]
    %v1100 = vld [vmem:[%s1 + $0x30] sm:$0xff]
    %v1101 = vld [vmem:[%s1 + $0x38] sm:$0xff]
    %vm1102 = vcmp.gt.s32.totalorder %v1094, 0
    %vm1103 = vcmp.gt.s32.totalorder %v1095, 0
    %vm1104 = vcmp.gt.s32.totalorder %v1096, 0
    %vm1105 = vcmp.gt.s32.totalorder %v1097, 0
    %vm1106 = vcmp.gt.s32.totalorder %v1098, 0
    %vm1107 = vcmp.gt.s32.totalorder %v1099, 0
    %vm1108 = vcmp.gt.s32.totalorder %v1100, 0
    %vm1109 = vcmp.gt.s32.totalorder %v1101, 0
    %v1174 = vlaneseq
    %v1175 = vand.u32 %v1174, 127
    %v1176 = vlaneseq
    %v1177 = vshrl.u32 %v1176, 7
    %v1178 = vsub.s32 %v1175, %v1177
    %v1179 = vrot.slane %v967, %v1178
    %v1180 = vlaneseq
    %v1181 = vshrl.u32 %v1180, 7
    %v1182 = vsub.s32 %v1175, %v1181
    %v1183 = vrot.slane %v969, %v1182
    %v1184 = vlaneseq
    %v1185 = vshrl.u32 %v1184, 7
    %v1186 = vsub.s32 %v1175, %v1185
    %v1187 = vrot.slane %v971, %v1186
    %v1188 = vlaneseq
    %v1189 = vshrl.u32 %v1188, 7
    %v1190 = vsub.s32 %v1175, %v1189
    %v1191 = vrot.slane %v973, %v1190
    %v1192 = vlaneseq
    %v1193 = vshrl.u32 %v1192, 7
    %v1194 = vsub.s32 %v1175, %v1193
    %v1195 = vrot.slane %v975, %v1194
    %v1196 = vlaneseq
    %v1197 = vshrl.u32 %v1196, 7
    %v1198 = vsub.s32 %v1175, %v1197
    %v1199 = vrot.slane %v977, %v1198
    %v1200 = vlaneseq
    %v1201 = vshrl.u32 %v1200, 7
    %v1202 = vsub.s32 %v1175, %v1201
    %v1203 = vrot.slane %v979, %v1202
    %v1204 = vlaneseq
    %v1205 = vshrl.u32 %v1204, 7
    %v1206 = vsub.s32 %v1175, %v1205
    %v1207 = vrot.slane %v981, %v1206
    %v1208 = vlaneseq
    %v1209 = vshrl.u32 %v1208, 7
    %v1210 = vsub.s32 %v1175, %v1209
    %v1211 = vrot.slane %v983, %v1210
    %v1212 = vlaneseq
    %v1213 = vshrl.u32 %v1212, 7
    %v1214 = vsub.s32 %v1175, %v1213
    %v1215 = vrot.slane %v985, %v1214
    %v1216 = vlaneseq
    %v1217 = vshrl.u32 %v1216, 7
    %v1218 = vsub.s32 %v1175, %v1217
    %v1219 = vrot.slane %v987, %v1218
    %v1220 = vlaneseq
    %v1221 = vshrl.u32 %v1220, 7
    %v1222 = vsub.s32 %v1175, %v1221
    %v1223 = vrot.slane %v989, %v1222
    %v1224 = vlaneseq
    %v1225 = vshrl.u32 %v1224, 7
    %v1226 = vsub.s32 %v1175, %v1225
    %v1227 = vrot.slane %v991, %v1226
    %v1228 = vlaneseq
    %v1229 = vshrl.u32 %v1228, 7
    %v1230 = vsub.s32 %v1175, %v1229
    %v1231 = vrot.slane %v993, %v1230
    %v1232 = vlaneseq
    %v1233 = vshrl.u32 %v1232, 7
    %v1234 = vsub.s32 %v1175, %v1233
    %v1235 = vrot.slane %v995, %v1234
    %v1236 = vlaneseq
    %v1237 = vshrl.u32 %v1236, 7
    %v1238 = vsub.s32 %v1175, %v1237
    %v1239 = vrot.slane %v997, %v1238
    %v1240 = vlaneseq
    %v1241 = vshrl.u32 %v1240, 7
    %v1242 = vsub.s32 %v1175, %v1241
    %v1243 = vrot.slane %v999, %v1242
    %v1244 = vlaneseq
    %v1245 = vshrl.u32 %v1244, 7
    %v1246 = vsub.s32 %v1175, %v1245
    %v1247 = vrot.slane %v1001, %v1246
    %v1248 = vlaneseq
    %v1249 = vshrl.u32 %v1248, 7
    %v1250 = vsub.s32 %v1175, %v1249
    %v1251 = vrot.slane %v1003, %v1250
    %v1252 = vlaneseq
    %v1253 = vshrl.u32 %v1252, 7
    %v1254 = vsub.s32 %v1175, %v1253
    %v1255 = vrot.slane %v1005, %v1254
    %v1256 = vlaneseq
    %v1257 = vshrl.u32 %v1256, 7
    %v1258 = vsub.s32 %v1175, %v1257
    %v1259 = vrot.slane %v1007, %v1258
    %v1260 = vlaneseq
    %v1261 = vshrl.u32 %v1260, 7
    %v1262 = vsub.s32 %v1175, %v1261
    %v1263 = vrot.slane %v1009, %v1262
    %v1264 = vlaneseq
    %v1265 = vshrl.u32 %v1264, 7
    %v1266 = vsub.s32 %v1175, %v1265
    %v1267 = vrot.slane %v1011, %v1266
    %v1268 = vlaneseq
    %v1269 = vshrl.u32 %v1268, 7
    %v1270 = vsub.s32 %v1175, %v1269
    %v1271 = vrot.slane %v1013, %v1270
    %v1272 = vlaneseq
    %v1273 = vshrl.u32 %v1272, 7
    %v1274 = vsub.s32 %v1175, %v1273
    %v1275 = vrot.slane %v1015, %v1274
    %v1276 = vlaneseq
    %v1277 = vshrl.u32 %v1276, 7
    %v1278 = vsub.s32 %v1175, %v1277
    %v1279 = vrot.slane %v1017, %v1278
    %v1280 = vlaneseq
    %v1281 = vshrl.u32 %v1280, 7
    %v1282 = vsub.s32 %v1175, %v1281
    %v1283 = vrot.slane %v1019, %v1282
    %v1284 = vlaneseq
    %v1285 = vshrl.u32 %v1284, 7
    %v1286 = vsub.s32 %v1175, %v1285
    %v1287 = vrot.slane %v1021, %v1286
    %v1288 = vlaneseq
    %v1289 = vshrl.u32 %v1288, 7
    %v1290 = vsub.s32 %v1175, %v1289
    %v1291 = vrot.slane %v1023, %v1290
    %v1292 = vlaneseq
    %v1293 = vshrl.u32 %v1292, 7
    %v1294 = vsub.s32 %v1175, %v1293
    %v1295 = vrot.slane %v1025, %v1294
    %v1296 = vlaneseq
    %v1297 = vshrl.u32 %v1296, 7
    %v1298 = vsub.s32 %v1175, %v1297
    %v1299 = vrot.slane %v1027, %v1298
    %v1300 = vlaneseq
    %v1301 = vshrl.u32 %v1300, 7
    %v1302 = vsub.s32 %v1175, %v1301
    %v1303 = vrot.slane %v1029, %v1302
    %v1304 = vlaneseq
    %v1305 = vshrl.u32 %v1304, 7
    %v1306 = vsub.s32 %v1175, %v1305
    %v1307 = vrot.slane %v1031, %v1306
    %v1308 = vlaneseq
    %v1309 = vshrl.u32 %v1308, 7
    %v1310 = vsub.s32 %v1175, %v1309
    %v1311 = vrot.slane %v1033, %v1310
    %v1312 = vlaneseq
    %v1313 = vshrl.u32 %v1312, 7
    %v1314 = vsub.s32 %v1175, %v1313
    %v1315 = vrot.slane %v1035, %v1314
    %v1316 = vlaneseq
    %v1317 = vshrl.u32 %v1316, 7
    %v1318 = vsub.s32 %v1175, %v1317
    %v1319 = vrot.slane %v1037, %v1318
    %v1320 = vlaneseq
    %v1321 = vshrl.u32 %v1320, 7
    %v1322 = vsub.s32 %v1175, %v1321
    %v1323 = vrot.slane %v1039, %v1322
    %v1324 = vlaneseq
    %v1325 = vshrl.u32 %v1324, 7
    %v1326 = vsub.s32 %v1175, %v1325
    %v1327 = vrot.slane %v1041, %v1326
    %v1328 = vlaneseq
    %v1329 = vshrl.u32 %v1328, 7
    %v1330 = vsub.s32 %v1175, %v1329
    %v1331 = vrot.slane %v1043, %v1330
    %v1332 = vlaneseq
    %v1333 = vshrl.u32 %v1332, 7
    %v1334 = vsub.s32 %v1175, %v1333
    %v1335 = vrot.slane %v1045, %v1334
    %v1336 = vlaneseq
    %v1337 = vshrl.u32 %v1336, 7
    %v1338 = vsub.s32 %v1175, %v1337
    %v1339 = vrot.slane %v1047, %v1338
    %v1340 = vlaneseq
    %v1341 = vshrl.u32 %v1340, 7
    %v1342 = vsub.s32 %v1175, %v1341
    %v1343 = vrot.slane %v1049, %v1342
    %v1344 = vlaneseq
    %v1345 = vshrl.u32 %v1344, 7
    %v1346 = vsub.s32 %v1175, %v1345
    %v1347 = vrot.slane %v1051, %v1346
    %v1348 = vlaneseq
    %v1349 = vshrl.u32 %v1348, 7
    %v1350 = vsub.s32 %v1175, %v1349
    %v1351 = vrot.slane %v1053, %v1350
    %v1352 = vlaneseq
    %v1353 = vshrl.u32 %v1352, 7
    %v1354 = vsub.s32 %v1175, %v1353
    %v1355 = vrot.slane %v1055, %v1354
    %v1356 = vlaneseq
    %v1357 = vshrl.u32 %v1356, 7
    %v1358 = vsub.s32 %v1175, %v1357
    %v1359 = vrot.slane %v1057, %v1358
    %v1360 = vlaneseq
    %v1361 = vshrl.u32 %v1360, 7
    %v1362 = vsub.s32 %v1175, %v1361
    %v1363 = vrot.slane %v1059, %v1362
    %v1364 = vlaneseq
    %v1365 = vshrl.u32 %v1364, 7
    %v1366 = vsub.s32 %v1175, %v1365
    %v1367 = vrot.slane %v1061, %v1366
    %v1368 = vlaneseq
    %v1369 = vshrl.u32 %v1368, 7
    %v1370 = vsub.s32 %v1175, %v1369
    %v1371 = vrot.slane %v1063, %v1370
    %v1372 = vlaneseq
    %v1373 = vshrl.u32 %v1372, 7
    %v1374 = vsub.s32 %v1175, %v1373
    %v1375 = vrot.slane %v1065, %v1374
    %v1376 = vlaneseq
    %v1377 = vshrl.u32 %v1376, 7
    %v1378 = vsub.s32 %v1175, %v1377
    %v1379 = vrot.slane %v1067, %v1378
    %v1380 = vlaneseq
    %v1381 = vshrl.u32 %v1380, 7
    %v1382 = vsub.s32 %v1175, %v1381
    %v1383 = vrot.slane %v1069, %v1382
    %v1384 = vlaneseq
    %v1385 = vshrl.u32 %v1384, 7
    %v1386 = vsub.s32 %v1175, %v1385
    %v1387 = vrot.slane %v1071, %v1386
    %v1388 = vlaneseq
    %v1389 = vshrl.u32 %v1388, 7
    %v1390 = vsub.s32 %v1175, %v1389
    %v1391 = vrot.slane %v1073, %v1390
    %v1392 = vlaneseq
    %v1393 = vshrl.u32 %v1392, 7
    %v1394 = vsub.s32 %v1175, %v1393
    %v1395 = vrot.slane %v1075, %v1394
    %v1396 = vlaneseq
    %v1397 = vshrl.u32 %v1396, 7
    %v1398 = vsub.s32 %v1175, %v1397
    %v1399 = vrot.slane %v1077, %v1398
    %v1400 = vlaneseq
    %v1401 = vshrl.u32 %v1400, 7
    %v1402 = vsub.s32 %v1175, %v1401
    %v1403 = vrot.slane %v1079, %v1402
    %v1404 = vlaneseq
    %v1405 = vshrl.u32 %v1404, 7
    %v1406 = vsub.s32 %v1175, %v1405
    %v1407 = vrot.slane %v1081, %v1406
    %v1408 = vlaneseq
    %v1409 = vshrl.u32 %v1408, 7
    %v1410 = vsub.s32 %v1175, %v1409
    %v1411 = vrot.slane %v1083, %v1410
    %v1412 = vlaneseq
    %v1413 = vshrl.u32 %v1412, 7
    %v1414 = vsub.s32 %v1175, %v1413
    %v1415 = vrot.slane %v1085, %v1414
    %v1416 = vlaneseq
    %v1417 = vshrl.u32 %v1416, 7
    %v1418 = vsub.s32 %v1175, %v1417
    %v1419 = vrot.slane %v1087, %v1418
    %v1420 = vlaneseq
    %v1421 = vshrl.u32 %v1420, 7
    %v1422 = vsub.s32 %v1175, %v1421
    %v1423 = vrot.slane %v1089, %v1422
    %v1424 = vlaneseq
    %v1425 = vshrl.u32 %v1424, 7
    %v1426 = vsub.s32 %v1175, %v1425
    %v1427 = vrot.slane %v1091, %v1426
    %v1428 = vlaneseq
    %v1429 = vshrl.u32 %v1428, 7
    %v1430 = vsub.s32 %v1175, %v1429
    %v1431 = vrot.slane %v1093, %v1430
    %vm1432 = vcmask 1041409
    %v1433 = vsel %vm1432, %v1183, %v1179
    %vm1434 = vcmask 1042434
    %v1435 = vsel %vm1434, %v1187, %v1433
    %vm1436 = vcmask 1043459
    %v1437 = vsel %vm1436, %v1191, %v1435
    %vm1438 = vcmask 1044484
    %v1439 = vsel %vm1438, %v1195, %v1437
    %vm1440 = vcmask 1045509
    %v1441 = vsel %vm1440, %v1199, %v1439
    %vm1442 = vcmask 1046534
    %v1443 = vsel %vm1442, %v1203, %v1441
    %vm1444 = vcmask 1047559
    %v1445 = vsel %vm1444, %v1207, %v1443
    %v1446 = vsel %vm1432, %v1215, %v1211
    %v1447 = vsel %vm1434, %v1219, %v1446
    %v1448 = vsel %vm1436, %v1223, %v1447
    %v1449 = vsel %vm1438, %v1227, %v1448
    %v1450 = vsel %vm1440, %v1231, %v1449
    %v1451 = vsel %vm1442, %v1235, %v1450
    %v1452 = vsel %vm1444, %v1239, %v1451
    %v1453 = vsel %vm1432, %v1247, %v1243
    %v1454 = vsel %vm1434, %v1251, %v1453
    %v1455 = vsel %vm1436, %v1255, %v1454
    %v1456 = vsel %vm1438, %v1259, %v1455
    %v1457 = vsel %vm1440, %v1263, %v1456
    %v1458 = vsel %vm1442, %v1267, %v1457
    %v1459 = vsel %vm1444, %v1271, %v1458
    %v1460 = vsel %vm1432, %v1279, %v1275
    %v1461 = vsel %vm1434, %v1283, %v1460
    %v1462 = vsel %vm1436, %v1287, %v1461
    %v1463 = vsel %vm1438, %v1291, %v1462
    %v1464 = vsel %vm1440, %v1295, %v1463
    %v1465 = vsel %vm1442, %v1299, %v1464
    %v1466 = vsel %vm1444, %v1303, %v1465
    %v1467 = vsel %vm1432, %v1311, %v1307
    %v1468 = vsel %vm1434, %v1315, %v1467
    %v1469 = vsel %vm1436, %v1319, %v1468
    %v1470 = vsel %vm1438, %v1323, %v1469
    %v1471 = vsel %vm1440, %v1327, %v1470
    %v1472 = vsel %vm1442, %v1331, %v1471
    %v1473 = vsel %vm1444, %v1335, %v1472
    %v1474 = vsel %vm1432, %v1343, %v1339
    %v1475 = vsel %vm1434, %v1347, %v1474
    %v1476 = vsel %vm1436, %v1351, %v1475
    %v1477 = vsel %vm1438, %v1355, %v1476
    %v1478 = vsel %vm1440, %v1359, %v1477
    %v1479 = vsel %vm1442, %v1363, %v1478
    %v1480 = vsel %vm1444, %v1367, %v1479
    %v1481 = vsel %vm1432, %v1375, %v1371
    %v1482 = vsel %vm1434, %v1379, %v1481
    %v1483 = vsel %vm1436, %v1383, %v1482
    %v1484 = vsel %vm1438, %v1387, %v1483
    %v1485 = vsel %vm1440, %v1391, %v1484
    %v1486 = vsel %vm1442, %v1395, %v1485
    %v1487 = vsel %vm1444, %v1399, %v1486
    %v1488 = vsel %vm1432, %v1407, %v1403
    %v1489 = vsel %vm1434, %v1411, %v1488
    %v1490 = vsel %vm1436, %v1415, %v1489
    %v1491 = vsel %vm1438, %v1419, %v1490
    %v1492 = vsel %vm1440, %v1423, %v1491
    %v1493 = vsel %vm1442, %v1427, %v1492
    %v1494 = vsel %vm1444, %v1431, %v1493
    %v1503 = vsel %vm1102, %v1445, -inf
    %v1504 = vsel %vm1103, %v1452, -inf
    %v1505 = vsel %vm1104, %v1459, -inf
    %v1506 = vsel %vm1105, %v1466, -inf
    %v1507 = vsel %vm1106, %v1473, -inf
    %v1508 = vsel %vm1107, %v1480, -inf
    %v1509 = vsel %vm1108, %v1487, -inf
    %v1510 = vsel %vm1109, %v1494, -inf
    %vm1511 = vcmask 64512
    %v1512 = vsel %vm1511, %v1503, -inf
    %1513 = vmax.xlane.f32.xlu0 %v1512
    %v1514 = vpop.xlane.xlu0 %1513
    %v1515 = vsel %vm1511, %v1504, -inf
    %1516 = vmax.xlane.f32.xlu0 %v1515
    %v1517 = vpop.xlane.xlu0 %1516
    %v1518 = vsel %vm1511, %v1505, -inf
    %1519 = vmax.xlane.f32.xlu0 %v1518
    %v1520 = vpop.xlane.xlu0 %1519
    %v1521 = vsel %vm1511, %v1506, -inf
    %1522 = vmax.xlane.f32.xlu0 %v1521
    %v1523 = vpop.xlane.xlu0 %1522
    %v1524 = vsel %vm1511, %v1507, -inf
    %1525 = vmax.xlane.f32.xlu0 %v1524
    %v1526 = vpop.xlane.xlu0 %1525
    %v1527 = vsel %vm1511, %v1508, -inf
    %1528 = vmax.xlane.f32.xlu0 %v1527
    %v1529 = vpop.xlane.xlu0 %1528
    %v1530 = vsel %vm1511, %v1509, -inf
    %1531 = vmax.xlane.f32.xlu0 %v1530
    %v1532 = vpop.xlane.xlu0 %1531
    %v1533 = vsel %vm1511, %v1510, -inf
    %1534 = vmax.xlane.f32.xlu0 %v1533
    %v1535 = vpop.xlane.xlu0 %1534
    %v1536 = vsub.f32 %v1503, %v1514
    %v1537 = vsub.f32 %v1504, %v1517
    %v1538 = vsub.f32 %v1505, %v1520
    %v1539 = vsub.f32 %v1506, %v1523
    %v1540 = vsub.f32 %v1507, %v1526
    %v1541 = vsub.f32 %v1508, %v1529
    %v1542 = vsub.f32 %v1509, %v1532
    %v1543 = vsub.f32 %v1510, %v1535
    %v1544 = vmul.f32 %v1536, 1.442695
    %v1545 = vpow.pop %v1544
    %v1546 = vmul.f32 %v1537, 1.442695
    %v1547 = vpow.pop %v1546
    %v1548 = vmul.f32 %v1538, 1.442695
    %v1549 = vpow.pop %v1548
    %v1550 = vmul.f32 %v1539, 1.442695
    %v1551 = vpow.pop %v1550
    %v1552 = vmul.f32 %v1540, 1.442695
    %v1553 = vpow.pop %v1552
    %v1554 = vmul.f32 %v1541, 1.442695
    %v1555 = vpow.pop %v1554
    %v1556 = vmul.f32 %v1542, 1.442695
    %v1557 = vpow.pop %v1556
    %v1558 = vmul.f32 %v1543, 1.442695
    %v1559 = vpow.pop %v1558
    %v1560 = vsel %vm1511, %v1545, 0.0
    %1561 = vadd.xlane.f32.xlu0 %v1560
    %v1562 = vpop.xlane.xlu0 %1561
    %v1563 = vsel %vm1511, %v1547, 0.0
    %1564 = vadd.xlane.f32.xlu0 %v1563
    %v1565 = vpop.xlane.xlu0 %1564
    %v1566 = vsel %vm1511, %v1549, 0.0
    %1567 = vadd.xlane.f32.xlu0 %v1566
    %v1568 = vpop.xlane.xlu0 %1567
    %v1569 = vsel %vm1511, %v1551, 0.0
    %1570 = vadd.xlane.f32.xlu0 %v1569
    %v1571 = vpop.xlane.xlu0 %1570
    %v1572 = vsel %vm1511, %v1553, 0.0
    %1573 = vadd.xlane.f32.xlu0 %v1572
    %v1574 = vpop.xlane.xlu0 %1573
    %v1575 = vsel %vm1511, %v1555, 0.0
    %1576 = vadd.xlane.f32.xlu0 %v1575
    %v1577 = vpop.xlane.xlu0 %1576
    %v1578 = vsel %vm1511, %v1557, 0.0
    %1579 = vadd.xlane.f32.xlu0 %v1578
    %v1580 = vpop.xlane.xlu0 %1579
    %v1581 = vsel %vm1511, %v1559, 0.0
    %1582 = vadd.xlane.f32.xlu0 %v1581
    %v1583 = vpop.xlane.xlu0 %1582
    %v1584 = vrcp.pop %v1562
    %v1585 = vmul.f32 %v1545, %v1584
    %v1586 = vrcp.pop %v1565
    %v1587 = vmul.f32 %v1547, %v1586
    %v1588 = vrcp.pop %v1568
    %v1589 = vmul.f32 %v1549, %v1588
    %v1590 = vrcp.pop %v1571
    %v1591 = vmul.f32 %v1551, %v1590
    %v1592 = vrcp.pop %v1574
    %v1593 = vmul.f32 %v1553, %v1592
    %v1594 = vrcp.pop %v1577
    %v1595 = vmul.f32 %v1555, %v1594
    %v1596 = vrcp.pop %v1580
    %v1597 = vmul.f32 %v1557, %v1596
    %v1598 = vrcp.pop %v1583
    %v1599 = vmul.f32 %v1559, %v1598
    %v1600 = vlaneseq
    %v1601 = vshrl.u32 %v1600, 7
    %v1602 = vsub.s32 0, %v1601
    %v1603 = vrot.slane %v1585, %v1602
    %1605 = vbcast.lane.b32.xlu0 %v1603, 256
    %v1606 = vpop.permute.xlu0 %1605
    %v1607 = vlaneseq
    %v1608 = vshrl.u32 %v1607, 7
    %v1609 = vsub.s32 1, %v1608
    %v1610 = vrot.slane %v1585, %v1609
    %1612 = vbcast.lane.b32.xlu0 %v1610, 256
    %v1613 = vpop.permute.xlu0 %1612
    %v1614 = vlaneseq
    %v1615 = vshrl.u32 %v1614, 7
    %v1616 = vsub.s32 2, %v1615
    %v1617 = vrot.slane %v1585, %v1616
    %1619 = vbcast.lane.b32.xlu0 %v1617, 256
    %v1620 = vpop.permute.xlu0 %1619
    %v1621 = vlaneseq
    %v1622 = vshrl.u32 %v1621, 7
    %v1623 = vsub.s32 3, %v1622
    %v1624 = vrot.slane %v1585, %v1623
    %1626 = vbcast.lane.b32.xlu0 %v1624, 256
    %v1627 = vpop.permute.xlu0 %1626
    %v1628 = vlaneseq
    %v1629 = vshrl.u32 %v1628, 7
    %v1630 = vsub.s32 4, %v1629
    %v1631 = vrot.slane %v1585, %v1630
    %1633 = vbcast.lane.b32.xlu0 %v1631, 256
    %v1634 = vpop.permute.xlu0 %1633
    %v1635 = vlaneseq
    %v1636 = vshrl.u32 %v1635, 7
    %v1637 = vsub.s32 5, %v1636
    %v1638 = vrot.slane %v1585, %v1637
    %1640 = vbcast.lane.b32.xlu0 %v1638, 256
    %v1641 = vpop.permute.xlu0 %1640
    %v1642 = vlaneseq
    %v1643 = vshrl.u32 %v1642, 7
    %v1644 = vsub.s32 6, %v1643
    %v1645 = vrot.slane %v1585, %v1644
    %1647 = vbcast.lane.b32.xlu0 %v1645, 256
    %v1648 = vpop.permute.xlu0 %1647
    %v1649 = vlaneseq
    %v1650 = vshrl.u32 %v1649, 7
    %v1651 = vsub.s32 7, %v1650
    %v1652 = vrot.slane %v1585, %v1651
    %1654 = vbcast.lane.b32.xlu0 %v1652, 256
    %v1655 = vpop.permute.xlu0 %1654
    %v1656 = vlaneseq
    %v1657 = vshrl.u32 %v1656, 7
    %v1658 = vsub.s32 0, %v1657
    %v1659 = vrot.slane %v1587, %v1658
    %1661 = vbcast.lane.b32.xlu0 %v1659, 256
    %v1662 = vpop.permute.xlu0 %1661
    %v1663 = vlaneseq
    %v1664 = vshrl.u32 %v1663, 7
    %v1665 = vsub.s32 1, %v1664
    %v1666 = vrot.slane %v1587, %v1665
    %1668 = vbcast.lane.b32.xlu0 %v1666, 256
    %v1669 = vpop.permute.xlu0 %1668
    %v1670 = vlaneseq
    %v1671 = vshrl.u32 %v1670, 7
    %v1672 = vsub.s32 2, %v1671
    %v1673 = vrot.slane %v1587, %v1672
    %1675 = vbcast.lane.b32.xlu0 %v1673, 256
    %v1676 = vpop.permute.xlu0 %1675
    %v1677 = vlaneseq
    %v1678 = vshrl.u32 %v1677, 7
    %v1679 = vsub.s32 3, %v1678
    %v1680 = vrot.slane %v1587, %v1679
    %1682 = vbcast.lane.b32.xlu0 %v1680, 256
    %v1683 = vpop.permute.xlu0 %1682
    %v1684 = vlaneseq
    %v1685 = vshrl.u32 %v1684, 7
    %v1686 = vsub.s32 4, %v1685
    %v1687 = vrot.slane %v1587, %v1686
    %1689 = vbcast.lane.b32.xlu0 %v1687, 256
    %v1690 = vpop.permute.xlu0 %1689
    %v1691 = vlaneseq
    %v1692 = vshrl.u32 %v1691, 7
    %v1693 = vsub.s32 5, %v1692
    %v1694 = vrot.slane %v1587, %v1693
    %1696 = vbcast.lane.b32.xlu0 %v1694, 256
    %v1697 = vpop.permute.xlu0 %1696
    %v1698 = vlaneseq
    %v1699 = vshrl.u32 %v1698, 7
    %v1700 = vsub.s32 6, %v1699
    %v1701 = vrot.slane %v1587, %v1700
    %1703 = vbcast.lane.b32.xlu0 %v1701, 256
    %v1704 = vpop.permute.xlu0 %1703
    %v1705 = vlaneseq
    %v1706 = vshrl.u32 %v1705, 7
    %v1707 = vsub.s32 7, %v1706
    %v1708 = vrot.slane %v1587, %v1707
    %1710 = vbcast.lane.b32.xlu0 %v1708, 256
    %v1711 = vpop.permute.xlu0 %1710
    %v1712 = vlaneseq
    %v1713 = vshrl.u32 %v1712, 7
    %v1714 = vsub.s32 0, %v1713
    %v1715 = vrot.slane %v1589, %v1714
    %1717 = vbcast.lane.b32.xlu0 %v1715, 256
    %v1718 = vpop.permute.xlu0 %1717
    %v1719 = vlaneseq
    %v1720 = vshrl.u32 %v1719, 7
    %v1721 = vsub.s32 1, %v1720
    %v1722 = vrot.slane %v1589, %v1721
    %1724 = vbcast.lane.b32.xlu0 %v1722, 256
    %v1725 = vpop.permute.xlu0 %1724
    %v1726 = vlaneseq
    %v1727 = vshrl.u32 %v1726, 7
    %v1728 = vsub.s32 2, %v1727
    %v1729 = vrot.slane %v1589, %v1728
    %1731 = vbcast.lane.b32.xlu0 %v1729, 256
    %v1732 = vpop.permute.xlu0 %1731
    %v1733 = vlaneseq
    %v1734 = vshrl.u32 %v1733, 7
    %v1735 = vsub.s32 3, %v1734
    %v1736 = vrot.slane %v1589, %v1735
    %1738 = vbcast.lane.b32.xlu0 %v1736, 256
    %v1739 = vpop.permute.xlu0 %1738
    %v1740 = vlaneseq
    %v1741 = vshrl.u32 %v1740, 7
    %v1742 = vsub.s32 4, %v1741
    %v1743 = vrot.slane %v1589, %v1742
    %1745 = vbcast.lane.b32.xlu0 %v1743, 256
    %v1746 = vpop.permute.xlu0 %1745
    %v1747 = vlaneseq
    %v1748 = vshrl.u32 %v1747, 7
    %v1749 = vsub.s32 5, %v1748
    %v1750 = vrot.slane %v1589, %v1749
    %1752 = vbcast.lane.b32.xlu0 %v1750, 256
    %v1753 = vpop.permute.xlu0 %1752
    %v1754 = vlaneseq
    %v1755 = vshrl.u32 %v1754, 7
    %v1756 = vsub.s32 6, %v1755
    %v1757 = vrot.slane %v1589, %v1756
    %1759 = vbcast.lane.b32.xlu0 %v1757, 256
    %v1760 = vpop.permute.xlu0 %1759
    %v1761 = vlaneseq
    %v1762 = vshrl.u32 %v1761, 7
    %v1763 = vsub.s32 7, %v1762
    %v1764 = vrot.slane %v1589, %v1763
    %1766 = vbcast.lane.b32.xlu0 %v1764, 256
    %v1767 = vpop.permute.xlu0 %1766
    %v1768 = vlaneseq
    %v1769 = vshrl.u32 %v1768, 7
    %v1770 = vsub.s32 0, %v1769
    %v1771 = vrot.slane %v1591, %v1770
    %1773 = vbcast.lane.b32.xlu0 %v1771, 256
    %v1774 = vpop.permute.xlu0 %1773
    %v1775 = vlaneseq
    %v1776 = vshrl.u32 %v1775, 7
    %v1777 = vsub.s32 1, %v1776
    %v1778 = vrot.slane %v1591, %v1777
    %1780 = vbcast.lane.b32.xlu0 %v1778, 256
    %v1781 = vpop.permute.xlu0 %1780
    %v1782 = vlaneseq
    %v1783 = vshrl.u32 %v1782, 7
    %v1784 = vsub.s32 2, %v1783
    %v1785 = vrot.slane %v1591, %v1784
    %1787 = vbcast.lane.b32.xlu0 %v1785, 256
    %v1788 = vpop.permute.xlu0 %1787
    %v1789 = vlaneseq
    %v1790 = vshrl.u32 %v1789, 7
    %v1791 = vsub.s32 3, %v1790
    %v1792 = vrot.slane %v1591, %v1791
    %1794 = vbcast.lane.b32.xlu0 %v1792, 256
    %v1795 = vpop.permute.xlu0 %1794
    %v1796 = vlaneseq
    %v1797 = vshrl.u32 %v1796, 7
    %v1798 = vsub.s32 4, %v1797
    %v1799 = vrot.slane %v1591, %v1798
    %1801 = vbcast.lane.b32.xlu0 %v1799, 256
    %v1802 = vpop.permute.xlu0 %1801
    %v1803 = vlaneseq
    %v1804 = vshrl.u32 %v1803, 7
    %v1805 = vsub.s32 5, %v1804
    %v1806 = vrot.slane %v1591, %v1805
    %1808 = vbcast.lane.b32.xlu0 %v1806, 256
    %v1809 = vpop.permute.xlu0 %1808
    %v1810 = vlaneseq
    %v1811 = vshrl.u32 %v1810, 7
    %v1812 = vsub.s32 6, %v1811
    %v1813 = vrot.slane %v1591, %v1812
    %1815 = vbcast.lane.b32.xlu0 %v1813, 256
    %v1816 = vpop.permute.xlu0 %1815
    %v1817 = vlaneseq
    %v1818 = vshrl.u32 %v1817, 7
    %v1819 = vsub.s32 7, %v1818
    %v1820 = vrot.slane %v1591, %v1819
    %1822 = vbcast.lane.b32.xlu0 %v1820, 256
    %v1823 = vpop.permute.xlu0 %1822
    %v1824 = vlaneseq
    %v1825 = vshrl.u32 %v1824, 7
    %v1826 = vsub.s32 0, %v1825
    %v1827 = vrot.slane %v1593, %v1826
    %1829 = vbcast.lane.b32.xlu0 %v1827, 256
    %v1830 = vpop.permute.xlu0 %1829
    %v1831 = vlaneseq
    %v1832 = vshrl.u32 %v1831, 7
    %v1833 = vsub.s32 1, %v1832
    %v1834 = vrot.slane %v1593, %v1833
    %1836 = vbcast.lane.b32.xlu0 %v1834, 256
    %v1837 = vpop.permute.xlu0 %1836
    %v1838 = vlaneseq
    %v1839 = vshrl.u32 %v1838, 7
    %v1840 = vsub.s32 2, %v1839
    %v1841 = vrot.slane %v1593, %v1840
    %1843 = vbcast.lane.b32.xlu0 %v1841, 256
    %v1844 = vpop.permute.xlu0 %1843
    %v1845 = vlaneseq
    %v1846 = vshrl.u32 %v1845, 7
    %v1847 = vsub.s32 3, %v1846
    %v1848 = vrot.slane %v1593, %v1847
    %1850 = vbcast.lane.b32.xlu0 %v1848, 256
    %v1851 = vpop.permute.xlu0 %1850
    %v1852 = vlaneseq
    %v1853 = vshrl.u32 %v1852, 7
    %v1854 = vsub.s32 4, %v1853
    %v1855 = vrot.slane %v1593, %v1854
    %1857 = vbcast.lane.b32.xlu0 %v1855, 256
    %v1858 = vpop.permute.xlu0 %1857
    %v1859 = vlaneseq
    %v1860 = vshrl.u32 %v1859, 7
    %v1861 = vsub.s32 5, %v1860
    %v1862 = vrot.slane %v1593, %v1861
    %1864 = vbcast.lane.b32.xlu0 %v1862, 256
    %v1865 = vpop.permute.xlu0 %1864
    %v1866 = vlaneseq
    %v1867 = vshrl.u32 %v1866, 7
    %v1868 = vsub.s32 6, %v1867
    %v1869 = vrot.slane %v1593, %v1868
    %1871 = vbcast.lane.b32.xlu0 %v1869, 256
    %v1872 = vpop.permute.xlu0 %1871
    %v1873 = vlaneseq
    %v1874 = vshrl.u32 %v1873, 7
    %v1875 = vsub.s32 7, %v1874
    %v1876 = vrot.slane %v1593, %v1875
    %1878 = vbcast.lane.b32.xlu0 %v1876, 256
    %v1879 = vpop.permute.xlu0 %1878
    %v1880 = vlaneseq
    %v1881 = vshrl.u32 %v1880, 7
    %v1882 = vsub.s32 0, %v1881
    %v1883 = vrot.slane %v1595, %v1882
    %1885 = vbcast.lane.b32.xlu0 %v1883, 256
    %v1886 = vpop.permute.xlu0 %1885
    %v1887 = vlaneseq
    %v1888 = vshrl.u32 %v1887, 7
    %v1889 = vsub.s32 1, %v1888
    %v1890 = vrot.slane %v1595, %v1889
    %1892 = vbcast.lane.b32.xlu0 %v1890, 256
    %v1893 = vpop.permute.xlu0 %1892
    %v1894 = vlaneseq
    %v1895 = vshrl.u32 %v1894, 7
    %v1896 = vsub.s32 2, %v1895
    %v1897 = vrot.slane %v1595, %v1896
    %1899 = vbcast.lane.b32.xlu0 %v1897, 256
    %v1900 = vpop.permute.xlu0 %1899
    %v1901 = vlaneseq
    %v1902 = vshrl.u32 %v1901, 7
    %v1903 = vsub.s32 3, %v1902
    %v1904 = vrot.slane %v1595, %v1903
    %1906 = vbcast.lane.b32.xlu0 %v1904, 256
    %v1907 = vpop.permute.xlu0 %1906
    %v1908 = vlaneseq
    %v1909 = vshrl.u32 %v1908, 7
    %v1910 = vsub.s32 4, %v1909
    %v1911 = vrot.slane %v1595, %v1910
    %1913 = vbcast.lane.b32.xlu0 %v1911, 256
    %v1914 = vpop.permute.xlu0 %1913
    %v1915 = vlaneseq
    %v1916 = vshrl.u32 %v1915, 7
    %v1917 = vsub.s32 5, %v1916
    %v1918 = vrot.slane %v1595, %v1917
    %1920 = vbcast.lane.b32.xlu0 %v1918, 256
    %v1921 = vpop.permute.xlu0 %1920
    %v1922 = vlaneseq
    %v1923 = vshrl.u32 %v1922, 7
    %v1924 = vsub.s32 6, %v1923
    %v1925 = vrot.slane %v1595, %v1924
    %1927 = vbcast.lane.b32.xlu0 %v1925, 256
    %v1928 = vpop.permute.xlu0 %1927
    %v1929 = vlaneseq
    %v1930 = vshrl.u32 %v1929, 7
    %v1931 = vsub.s32 7, %v1930
    %v1932 = vrot.slane %v1595, %v1931
    %1934 = vbcast.lane.b32.xlu0 %v1932, 256
    %v1935 = vpop.permute.xlu0 %1934
    %v1936 = vlaneseq
    %v1937 = vshrl.u32 %v1936, 7
    %v1938 = vsub.s32 0, %v1937
    %v1939 = vrot.slane %v1597, %v1938
    %1941 = vbcast.lane.b32.xlu0 %v1939, 256
    %v1942 = vpop.permute.xlu0 %1941
    %v1943 = vlaneseq
    %v1944 = vshrl.u32 %v1943, 7
    %v1945 = vsub.s32 1, %v1944
    %v1946 = vrot.slane %v1597, %v1945
    %1948 = vbcast.lane.b32.xlu0 %v1946, 256
    %v1949 = vpop.permute.xlu0 %1948
    %v1950 = vlaneseq
    %v1951 = vshrl.u32 %v1950, 7
    %v1952 = vsub.s32 2, %v1951
    %v1953 = vrot.slane %v1597, %v1952
    %1955 = vbcast.lane.b32.xlu0 %v1953, 256
    %v1956 = vpop.permute.xlu0 %1955
    %v1957 = vlaneseq
    %v1958 = vshrl.u32 %v1957, 7
    %v1959 = vsub.s32 3, %v1958
    %v1960 = vrot.slane %v1597, %v1959
    %1962 = vbcast.lane.b32.xlu0 %v1960, 256
    %v1963 = vpop.permute.xlu0 %1962
    %v1964 = vlaneseq
    %v1965 = vshrl.u32 %v1964, 7
    %v1966 = vsub.s32 4, %v1965
    %v1967 = vrot.slane %v1597, %v1966
    %1969 = vbcast.lane.b32.xlu0 %v1967, 256
    %v1970 = vpop.permute.xlu0 %1969
    %v1971 = vlaneseq
    %v1972 = vshrl.u32 %v1971, 7
    %v1973 = vsub.s32 5, %v1972
    %v1974 = vrot.slane %v1597, %v1973
    %1976 = vbcast.lane.b32.xlu0 %v1974, 256
    %v1977 = vpop.permute.xlu0 %1976
    %v1978 = vlaneseq
    %v1979 = vshrl.u32 %v1978, 7
    %v1980 = vsub.s32 6, %v1979
    %v1981 = vrot.slane %v1597, %v1980
    %1983 = vbcast.lane.b32.xlu0 %v1981, 256
    %v1984 = vpop.permute.xlu0 %1983
    %v1985 = vlaneseq
    %v1986 = vshrl.u32 %v1985, 7
    %v1987 = vsub.s32 7, %v1986
    %v1988 = vrot.slane %v1597, %v1987
    %1990 = vbcast.lane.b32.xlu0 %v1988, 256
    %v1991 = vpop.permute.xlu0 %1990
    %v1992 = vlaneseq
    %v1993 = vshrl.u32 %v1992, 7
    %v1994 = vsub.s32 0, %v1993
    %v1995 = vrot.slane %v1599, %v1994
    %1997 = vbcast.lane.b32.xlu0 %v1995, 256
    %v1998 = vpop.permute.xlu0 %1997
    %v1999 = vlaneseq
    %v2000 = vshrl.u32 %v1999, 7
    %v2001 = vsub.s32 1, %v2000
    %v2002 = vrot.slane %v1599, %v2001
    %2004 = vbcast.lane.b32.xlu0 %v2002, 256
    %v2005 = vpop.permute.xlu0 %2004
    %v2006 = vlaneseq
    %v2007 = vshrl.u32 %v2006, 7
    %v2008 = vsub.s32 2, %v2007
    %v2009 = vrot.slane %v1599, %v2008
    %2011 = vbcast.lane.b32.xlu0 %v2009, 256
    %v2012 = vpop.permute.xlu0 %2011
    %v2013 = vlaneseq
    %v2014 = vshrl.u32 %v2013, 7
    %v2015 = vsub.s32 3, %v2014
    %v2016 = vrot.slane %v1599, %v2015
    %2018 = vbcast.lane.b32.xlu0 %v2016, 256
    %v2019 = vpop.permute.xlu0 %2018
    %v2020 = vlaneseq
    %v2021 = vshrl.u32 %v2020, 7
    %v2022 = vsub.s32 4, %v2021
    %v2023 = vrot.slane %v1599, %v2022
    %2025 = vbcast.lane.b32.xlu0 %v2023, 256
    %v2026 = vpop.permute.xlu0 %2025
    %v2027 = vlaneseq
    %v2028 = vshrl.u32 %v2027, 7
    %v2029 = vsub.s32 5, %v2028
    %v2030 = vrot.slane %v1599, %v2029
    %2032 = vbcast.lane.b32.xlu0 %v2030, 256
    %v2033 = vpop.permute.xlu0 %2032
    %v2034 = vlaneseq
    %v2035 = vshrl.u32 %v2034, 7
    %v2036 = vsub.s32 6, %v2035
    %v2037 = vrot.slane %v1599, %v2036
    %2039 = vbcast.lane.b32.xlu0 %v2037, 256
    %v2040 = vpop.permute.xlu0 %2039
    %v2041 = vlaneseq
    %v2042 = vshrl.u32 %v2041, 7
    %v2043 = vsub.s32 7, %v2042
    %v2044 = vrot.slane %v1599, %v2043
    %2046 = vbcast.lane.b32.xlu0 %v2044, 256
    %v2047 = vpop.permute.xlu0 %2046
    %v2048 = vmul.f32 %v1606, %v46
    %v2049 = vmul.f32 %v1613, %v47
    %v2050 = vmul.f32 %v1620, %v48
    %v2051 = vmul.f32 %v1627, %v49
    %v2052 = vmul.f32 %v1634, %v50
    %v2053 = vmul.f32 %v1641, %v51
    %v2054 = vmul.f32 %v1648, %v52
    %v2055 = vmul.f32 %v1655, %v53
    %v2056 = vmul.f32 %v1662, %v54
    %v2057 = vmul.f32 %v1669, %v55
    %v2058 = vmul.f32 %v1676, %v56
    %v2059 = vmul.f32 %v1683, %v57
    %v2060 = vmul.f32 %v1690, %v58
    %v2061 = vmul.f32 %v1697, %v59
    %v2062 = vmul.f32 %v1704, %v60
    %v2063 = vmul.f32 %v1711, %v61
    %v2064 = vmul.f32 %v1718, %v62
    %v2065 = vmul.f32 %v1725, %v63
    %v2066 = vmul.f32 %v1732, %v64
    %v2067 = vmul.f32 %v1739, %v65
    %v2068 = vmul.f32 %v1746, %v66
    %v2069 = vmul.f32 %v1753, %v67
    %v2070 = vmul.f32 %v1760, %v68
    %v2071 = vmul.f32 %v1767, %v69
    %v2072 = vmul.f32 %v1774, %v70
    %v2073 = vmul.f32 %v1781, %v71
    %v2074 = vmul.f32 %v1788, %v72
    %v2075 = vmul.f32 %v1795, %v73
    %v2076 = vmul.f32 %v1802, %v74
    %v2077 = vmul.f32 %v1809, %v75
    %v2078 = vmul.f32 %v1816, %v76
    %v2079 = vmul.f32 %v1823, %v77
    %v2080 = vmul.f32 %v1830, %v78
    %v2081 = vmul.f32 %v1837, %v79
    %v2082 = vmul.f32 %v1844, %v80
    %v2083 = vmul.f32 %v1851, %v81
    %v2084 = vmul.f32 %v1858, %v82
    %v2085 = vmul.f32 %v1865, %v83
    %v2086 = vmul.f32 %v1872, %v84
    %v2087 = vmul.f32 %v1879, %v85
    %v2088 = vmul.f32 %v1886, %v86
    %v2089 = vmul.f32 %v1893, %v87
    %v2090 = vmul.f32 %v1900, %v88
    %v2091 = vmul.f32 %v1907, %v89
    %v2092 = vmul.f32 %v1914, %v90
    %v2093 = vmul.f32 %v1921, %v91
    %v2094 = vmul.f32 %v1928, %v92
    %v2095 = vmul.f32 %v1935, %v93
    %v2096 = vmul.f32 %v1942, %v94
    %v2097 = vmul.f32 %v1949, %v95
    %v2098 = vmul.f32 %v1956, %v96
    %v2099 = vmul.f32 %v1963, %v97
    %v2100 = vmul.f32 %v1970, %v98
    %v2101 = vmul.f32 %v1977, %v99
    %v2102 = vmul.f32 %v1984, %v100
    %v2103 = vmul.f32 %v1991, %v101
    %v2104 = vmul.f32 %v1998, %v102
    %v2105 = vmul.f32 %v2005, %v103
    %v2106 = vmul.f32 %v2012, %v104
    %v2107 = vmul.f32 %v2019, %v105
    %v2108 = vmul.f32 %v2026, %v106
    %v2109 = vmul.f32 %v2033, %v107
    %v2110 = vmul.f32 %v2040, %v108
    %v2111 = vmul.f32 %v2047, %v109
    %v2112 = vrot.slane %v2048, 4
    %v2113 = vadd.f32 %v2048, %v2112
    %v2114 = vrot.slane %v2113, 2
    %v2115 = vadd.f32 %v2113, %v2114
    %v2116 = vrot.slane %v2115, 1
    %v2117 = vadd.f32 %v2115, %v2116
    %v2118 = vrot.slane %v2049, 4
    %v2119 = vadd.f32 %v2049, %v2118
    %v2120 = vrot.slane %v2119, 2
    %v2121 = vadd.f32 %v2119, %v2120
    %v2122 = vrot.slane %v2121, 1
    %v2123 = vadd.f32 %v2121, %v2122
    %v2124 = vrot.slane %v2050, 4
    %v2125 = vadd.f32 %v2050, %v2124
    %v2126 = vrot.slane %v2125, 2
    %v2127 = vadd.f32 %v2125, %v2126
    %v2128 = vrot.slane %v2127, 1
    %v2129 = vadd.f32 %v2127, %v2128
    %v2130 = vrot.slane %v2051, 4
    %v2131 = vadd.f32 %v2051, %v2130
    %v2132 = vrot.slane %v2131, 2
    %v2133 = vadd.f32 %v2131, %v2132
    %v2134 = vrot.slane %v2133, 1
    %v2135 = vadd.f32 %v2133, %v2134
    %v2136 = vrot.slane %v2052, 4
    %v2137 = vadd.f32 %v2052, %v2136
    %v2138 = vrot.slane %v2137, 2
    %v2139 = vadd.f32 %v2137, %v2138
    %v2140 = vrot.slane %v2139, 1
    %v2141 = vadd.f32 %v2139, %v2140
    %v2142 = vrot.slane %v2053, 4
    %v2143 = vadd.f32 %v2053, %v2142
    %v2144 = vrot.slane %v2143, 2
    %v2145 = vadd.f32 %v2143, %v2144
    %v2146 = vrot.slane %v2145, 1
    %v2147 = vadd.f32 %v2145, %v2146
    %v2148 = vrot.slane %v2054, 4
    %v2149 = vadd.f32 %v2054, %v2148
    %v2150 = vrot.slane %v2149, 2
    %v2151 = vadd.f32 %v2149, %v2150
    %v2152 = vrot.slane %v2151, 1
    %v2153 = vadd.f32 %v2151, %v2152
    %v2154 = vrot.slane %v2055, 4
    %v2155 = vadd.f32 %v2055, %v2154
    %v2156 = vrot.slane %v2155, 2
    %v2157 = vadd.f32 %v2155, %v2156
    %v2158 = vrot.slane %v2157, 1
    %v2159 = vadd.f32 %v2157, %v2158
    %v2160 = vrot.slane %v2056, 4
    %v2161 = vadd.f32 %v2056, %v2160
    %v2162 = vrot.slane %v2161, 2
    %v2163 = vadd.f32 %v2161, %v2162
    %v2164 = vrot.slane %v2163, 1
    %v2165 = vadd.f32 %v2163, %v2164
    %v2166 = vrot.slane %v2057, 4
    %v2167 = vadd.f32 %v2057, %v2166
    %v2168 = vrot.slane %v2167, 2
    %v2169 = vadd.f32 %v2167, %v2168
    %v2170 = vrot.slane %v2169, 1
    %v2171 = vadd.f32 %v2169, %v2170
    %v2172 = vrot.slane %v2058, 4
    %v2173 = vadd.f32 %v2058, %v2172
    %v2174 = vrot.slane %v2173, 2
    %v2175 = vadd.f32 %v2173, %v2174
    %v2176 = vrot.slane %v2175, 1
    %v2177 = vadd.f32 %v2175, %v2176
    %v2178 = vrot.slane %v2059, 4
    %v2179 = vadd.f32 %v2059, %v2178
    %v2180 = vrot.slane %v2179, 2
    %v2181 = vadd.f32 %v2179, %v2180
    %v2182 = vrot.slane %v2181, 1
    %v2183 = vadd.f32 %v2181, %v2182
    %v2184 = vrot.slane %v2060, 4
    %v2185 = vadd.f32 %v2060, %v2184
    %v2186 = vrot.slane %v2185, 2
    %v2187 = vadd.f32 %v2185, %v2186
    %v2188 = vrot.slane %v2187, 1
    %v2189 = vadd.f32 %v2187, %v2188
    %v2190 = vrot.slane %v2061, 4
    %v2191 = vadd.f32 %v2061, %v2190
    %v2192 = vrot.slane %v2191, 2
    %v2193 = vadd.f32 %v2191, %v2192
    %v2194 = vrot.slane %v2193, 1
    %v2195 = vadd.f32 %v2193, %v2194
    %v2196 = vrot.slane %v2062, 4
    %v2197 = vadd.f32 %v2062, %v2196
    %v2198 = vrot.slane %v2197, 2
    %v2199 = vadd.f32 %v2197, %v2198
    %v2200 = vrot.slane %v2199, 1
    %v2201 = vadd.f32 %v2199, %v2200
    %v2202 = vrot.slane %v2063, 4
    %v2203 = vadd.f32 %v2063, %v2202
    %v2204 = vrot.slane %v2203, 2
    %v2205 = vadd.f32 %v2203, %v2204
    %v2206 = vrot.slane %v2205, 1
    %v2207 = vadd.f32 %v2205, %v2206
    %v2208 = vrot.slane %v2064, 4
    %v2209 = vadd.f32 %v2064, %v2208
    %v2210 = vrot.slane %v2209, 2
    %v2211 = vadd.f32 %v2209, %v2210
    %v2212 = vrot.slane %v2211, 1
    %v2213 = vadd.f32 %v2211, %v2212
    %v2214 = vrot.slane %v2065, 4
    %v2215 = vadd.f32 %v2065, %v2214
    %v2216 = vrot.slane %v2215, 2
    %v2217 = vadd.f32 %v2215, %v2216
    %v2218 = vrot.slane %v2217, 1
    %v2219 = vadd.f32 %v2217, %v2218
    %v2220 = vrot.slane %v2066, 4
    %v2221 = vadd.f32 %v2066, %v2220
    %v2222 = vrot.slane %v2221, 2
    %v2223 = vadd.f32 %v2221, %v2222
    %v2224 = vrot.slane %v2223, 1
    %v2225 = vadd.f32 %v2223, %v2224
    %v2226 = vrot.slane %v2067, 4
    %v2227 = vadd.f32 %v2067, %v2226
    %v2228 = vrot.slane %v2227, 2
    %v2229 = vadd.f32 %v2227, %v2228
    %v2230 = vrot.slane %v2229, 1
    %v2231 = vadd.f32 %v2229, %v2230
    %v2232 = vrot.slane %v2068, 4
    %v2233 = vadd.f32 %v2068, %v2232
    %v2234 = vrot.slane %v2233, 2
    %v2235 = vadd.f32 %v2233, %v2234
    %v2236 = vrot.slane %v2235, 1
    %v2237 = vadd.f32 %v2235, %v2236
    %v2238 = vrot.slane %v2069, 4
    %v2239 = vadd.f32 %v2069, %v2238
    %v2240 = vrot.slane %v2239, 2
    %v2241 = vadd.f32 %v2239, %v2240
    %v2242 = vrot.slane %v2241, 1
    %v2243 = vadd.f32 %v2241, %v2242
    %v2244 = vrot.slane %v2070, 4
    %v2245 = vadd.f32 %v2070, %v2244
    %v2246 = vrot.slane %v2245, 2
    %v2247 = vadd.f32 %v2245, %v2246
    %v2248 = vrot.slane %v2247, 1
    %v2249 = vadd.f32 %v2247, %v2248
    %v2250 = vrot.slane %v2071, 4
    %v2251 = vadd.f32 %v2071, %v2250
    %v2252 = vrot.slane %v2251, 2
    %v2253 = vadd.f32 %v2251, %v2252
    %v2254 = vrot.slane %v2253, 1
    %v2255 = vadd.f32 %v2253, %v2254
    %v2256 = vrot.slane %v2072, 4
    %v2257 = vadd.f32 %v2072, %v2256
    %v2258 = vrot.slane %v2257, 2
    %v2259 = vadd.f32 %v2257, %v2258
    %v2260 = vrot.slane %v2259, 1
    %v2261 = vadd.f32 %v2259, %v2260
    %v2262 = vrot.slane %v2073, 4
    %v2263 = vadd.f32 %v2073, %v2262
    %v2264 = vrot.slane %v2263, 2
    %v2265 = vadd.f32 %v2263, %v2264
    %v2266 = vrot.slane %v2265, 1
    %v2267 = vadd.f32 %v2265, %v2266
    %v2268 = vrot.slane %v2074, 4
    %v2269 = vadd.f32 %v2074, %v2268
    %v2270 = vrot.slane %v2269, 2
    %v2271 = vadd.f32 %v2269, %v2270
    %v2272 = vrot.slane %v2271, 1
    %v2273 = vadd.f32 %v2271, %v2272
    %v2274 = vrot.slane %v2075, 4
    %v2275 = vadd.f32 %v2075, %v2274
    %v2276 = vrot.slane %v2275, 2
    %v2277 = vadd.f32 %v2275, %v2276
    %v2278 = vrot.slane %v2277, 1
    %v2279 = vadd.f32 %v2277, %v2278
    %v2280 = vrot.slane %v2076, 4
    %v2281 = vadd.f32 %v2076, %v2280
    %v2282 = vrot.slane %v2281, 2
    %v2283 = vadd.f32 %v2281, %v2282
    %v2284 = vrot.slane %v2283, 1
    %v2285 = vadd.f32 %v2283, %v2284
    %v2286 = vrot.slane %v2077, 4
    %v2287 = vadd.f32 %v2077, %v2286
    %v2288 = vrot.slane %v2287, 2
    %v2289 = vadd.f32 %v2287, %v2288
    %v2290 = vrot.slane %v2289, 1
    %v2291 = vadd.f32 %v2289, %v2290
    %v2292 = vrot.slane %v2078, 4
    %v2293 = vadd.f32 %v2078, %v2292
    %v2294 = vrot.slane %v2293, 2
    %v2295 = vadd.f32 %v2293, %v2294
    %v2296 = vrot.slane %v2295, 1
    %v2297 = vadd.f32 %v2295, %v2296
    %v2298 = vrot.slane %v2079, 4
    %v2299 = vadd.f32 %v2079, %v2298
    %v2300 = vrot.slane %v2299, 2
    %v2301 = vadd.f32 %v2299, %v2300
    %v2302 = vrot.slane %v2301, 1
    %v2303 = vadd.f32 %v2301, %v2302
    %v2304 = vrot.slane %v2080, 4
    %v2305 = vadd.f32 %v2080, %v2304
    %v2306 = vrot.slane %v2305, 2
    %v2307 = vadd.f32 %v2305, %v2306
    %v2308 = vrot.slane %v2307, 1
    %v2309 = vadd.f32 %v2307, %v2308
    %v2310 = vrot.slane %v2081, 4
    %v2311 = vadd.f32 %v2081, %v2310
    %v2312 = vrot.slane %v2311, 2
    %v2313 = vadd.f32 %v2311, %v2312
    %v2314 = vrot.slane %v2313, 1
    %v2315 = vadd.f32 %v2313, %v2314
    %v2316 = vrot.slane %v2082, 4
    %v2317 = vadd.f32 %v2082, %v2316
    %v2318 = vrot.slane %v2317, 2
    %v2319 = vadd.f32 %v2317, %v2318
    %v2320 = vrot.slane %v2319, 1
    %v2321 = vadd.f32 %v2319, %v2320
    %v2322 = vrot.slane %v2083, 4
    %v2323 = vadd.f32 %v2083, %v2322
    %v2324 = vrot.slane %v2323, 2
    %v2325 = vadd.f32 %v2323, %v2324
    %v2326 = vrot.slane %v2325, 1
    %v2327 = vadd.f32 %v2325, %v2326
    %v2328 = vrot.slane %v2084, 4
    %v2329 = vadd.f32 %v2084, %v2328
    %v2330 = vrot.slane %v2329, 2
    %v2331 = vadd.f32 %v2329, %v2330
    %v2332 = vrot.slane %v2331, 1
    %v2333 = vadd.f32 %v2331, %v2332
    %v2334 = vrot.slane %v2085, 4
    %v2335 = vadd.f32 %v2085, %v2334
    %v2336 = vrot.slane %v2335, 2
    %v2337 = vadd.f32 %v2335, %v2336
    %v2338 = vrot.slane %v2337, 1
    %v2339 = vadd.f32 %v2337, %v2338
    %v2340 = vrot.slane %v2086, 4
    %v2341 = vadd.f32 %v2086, %v2340
    %v2342 = vrot.slane %v2341, 2
    %v2343 = vadd.f32 %v2341, %v2342
    %v2344 = vrot.slane %v2343, 1
    %v2345 = vadd.f32 %v2343, %v2344
    %v2346 = vrot.slane %v2087, 4
    %v2347 = vadd.f32 %v2087, %v2346
    %v2348 = vrot.slane %v2347, 2
    %v2349 = vadd.f32 %v2347, %v2348
    %v2350 = vrot.slane %v2349, 1
    %v2351 = vadd.f32 %v2349, %v2350
    %v2352 = vrot.slane %v2088, 4
    %v2353 = vadd.f32 %v2088, %v2352
    %v2354 = vrot.slane %v2353, 2
    %v2355 = vadd.f32 %v2353, %v2354
    %v2356 = vrot.slane %v2355, 1
    %v2357 = vadd.f32 %v2355, %v2356
    %v2358 = vrot.slane %v2089, 4
    %v2359 = vadd.f32 %v2089, %v2358
    %v2360 = vrot.slane %v2359, 2
    %v2361 = vadd.f32 %v2359, %v2360
    %v2362 = vrot.slane %v2361, 1
    %v2363 = vadd.f32 %v2361, %v2362
    %v2364 = vrot.slane %v2090, 4
    %v2365 = vadd.f32 %v2090, %v2364
    %v2366 = vrot.slane %v2365, 2
    %v2367 = vadd.f32 %v2365, %v2366
    %v2368 = vrot.slane %v2367, 1
    %v2369 = vadd.f32 %v2367, %v2368
    %v2370 = vrot.slane %v2091, 4
    %v2371 = vadd.f32 %v2091, %v2370
    %v2372 = vrot.slane %v2371, 2
    %v2373 = vadd.f32 %v2371, %v2372
    %v2374 = vrot.slane %v2373, 1
    %v2375 = vadd.f32 %v2373, %v2374
    %v2376 = vrot.slane %v2092, 4
    %v2377 = vadd.f32 %v2092, %v2376
    %v2378 = vrot.slane %v2377, 2
    %v2379 = vadd.f32 %v2377, %v2378
    %v2380 = vrot.slane %v2379, 1
    %v2381 = vadd.f32 %v2379, %v2380
    %v2382 = vrot.slane %v2093, 4
    %v2383 = vadd.f32 %v2093, %v2382
    %v2384 = vrot.slane %v2383, 2
    %v2385 = vadd.f32 %v2383, %v2384
    %v2386 = vrot.slane %v2385, 1
    %v2387 = vadd.f32 %v2385, %v2386
    %v2388 = vrot.slane %v2094, 4
    %v2389 = vadd.f32 %v2094, %v2388
    %v2390 = vrot.slane %v2389, 2
    %v2391 = vadd.f32 %v2389, %v2390
    %v2392 = vrot.slane %v2391, 1
    %v2393 = vadd.f32 %v2391, %v2392
    %v2394 = vrot.slane %v2095, 4
    %v2395 = vadd.f32 %v2095, %v2394
    %v2396 = vrot.slane %v2395, 2
    %v2397 = vadd.f32 %v2395, %v2396
    %v2398 = vrot.slane %v2397, 1
    %v2399 = vadd.f32 %v2397, %v2398
    %v2400 = vrot.slane %v2096, 4
    %v2401 = vadd.f32 %v2096, %v2400
    %v2402 = vrot.slane %v2401, 2
    %v2403 = vadd.f32 %v2401, %v2402
    %v2404 = vrot.slane %v2403, 1
    %v2405 = vadd.f32 %v2403, %v2404
    %v2406 = vrot.slane %v2097, 4
    %v2407 = vadd.f32 %v2097, %v2406
    %v2408 = vrot.slane %v2407, 2
    %v2409 = vadd.f32 %v2407, %v2408
    %v2410 = vrot.slane %v2409, 1
    %v2411 = vadd.f32 %v2409, %v2410
    %v2412 = vrot.slane %v2098, 4
    %v2413 = vadd.f32 %v2098, %v2412
    %v2414 = vrot.slane %v2413, 2
    %v2415 = vadd.f32 %v2413, %v2414
    %v2416 = vrot.slane %v2415, 1
    %v2417 = vadd.f32 %v2415, %v2416
    %v2418 = vrot.slane %v2099, 4
    %v2419 = vadd.f32 %v2099, %v2418
    %v2420 = vrot.slane %v2419, 2
    %v2421 = vadd.f32 %v2419, %v2420
    %v2422 = vrot.slane %v2421, 1
    %v2423 = vadd.f32 %v2421, %v2422
    %v2424 = vrot.slane %v2100, 4
    %v2425 = vadd.f32 %v2100, %v2424
    %v2426 = vrot.slane %v2425, 2
    %v2427 = vadd.f32 %v2425, %v2426
    %v2428 = vrot.slane %v2427, 1
    %v2429 = vadd.f32 %v2427, %v2428
    %v2430 = vrot.slane %v2101, 4
    %v2431 = vadd.f32 %v2101, %v2430
    %v2432 = vrot.slane %v2431, 2
    %v2433 = vadd.f32 %v2431, %v2432
    %v2434 = vrot.slane %v2433, 1
    %v2435 = vadd.f32 %v2433, %v2434
    %v2436 = vrot.slane %v2102, 4
    %v2437 = vadd.f32 %v2102, %v2436
    %v2438 = vrot.slane %v2437, 2
    %v2439 = vadd.f32 %v2437, %v2438
    %v2440 = vrot.slane %v2439, 1
    %v2441 = vadd.f32 %v2439, %v2440
    %v2442 = vrot.slane %v2103, 4
    %v2443 = vadd.f32 %v2103, %v2442
    %v2444 = vrot.slane %v2443, 2
    %v2445 = vadd.f32 %v2443, %v2444
    %v2446 = vrot.slane %v2445, 1
    %v2447 = vadd.f32 %v2445, %v2446
    %v2448 = vrot.slane %v2104, 4
    %v2449 = vadd.f32 %v2104, %v2448
    %v2450 = vrot.slane %v2449, 2
    %v2451 = vadd.f32 %v2449, %v2450
    %v2452 = vrot.slane %v2451, 1
    %v2453 = vadd.f32 %v2451, %v2452
    %v2454 = vrot.slane %v2105, 4
    %v2455 = vadd.f32 %v2105, %v2454
    %v2456 = vrot.slane %v2455, 2
    %v2457 = vadd.f32 %v2455, %v2456
    %v2458 = vrot.slane %v2457, 1
    %v2459 = vadd.f32 %v2457, %v2458
    %v2460 = vrot.slane %v2106, 4
    %v2461 = vadd.f32 %v2106, %v2460
    %v2462 = vrot.slane %v2461, 2
    %v2463 = vadd.f32 %v2461, %v2462
    %v2464 = vrot.slane %v2463, 1
    %v2465 = vadd.f32 %v2463, %v2464
    %v2466 = vrot.slane %v2107, 4
    %v2467 = vadd.f32 %v2107, %v2466
    %v2468 = vrot.slane %v2467, 2
    %v2469 = vadd.f32 %v2467, %v2468
    %v2470 = vrot.slane %v2469, 1
    %v2471 = vadd.f32 %v2469, %v2470
    %v2472 = vrot.slane %v2108, 4
    %v2473 = vadd.f32 %v2108, %v2472
    %v2474 = vrot.slane %v2473, 2
    %v2475 = vadd.f32 %v2473, %v2474
    %v2476 = vrot.slane %v2475, 1
    %v2477 = vadd.f32 %v2475, %v2476
    %v2478 = vrot.slane %v2109, 4
    %v2479 = vadd.f32 %v2109, %v2478
    %v2480 = vrot.slane %v2479, 2
    %v2481 = vadd.f32 %v2479, %v2480
    %v2482 = vrot.slane %v2481, 1
    %v2483 = vadd.f32 %v2481, %v2482
    %v2484 = vrot.slane %v2110, 4
    %v2485 = vadd.f32 %v2110, %v2484
    %v2486 = vrot.slane %v2485, 2
    %v2487 = vadd.f32 %v2485, %v2486
    %v2488 = vrot.slane %v2487, 1
    %v2489 = vadd.f32 %v2487, %v2488
    %v2490 = vrot.slane %v2111, 4
    %v2491 = vadd.f32 %v2111, %v2490
    %v2492 = vrot.slane %v2491, 2
    %v2493 = vadd.f32 %v2491, %v2492
    %v2494 = vrot.slane %v2493, 1
    %v2495 = vadd.f32 %v2493, %v2494
    %v2560 = vsel %vm1432, %v2123, %v2117
    %v2561 = vsel %vm1434, %v2129, %v2560
    %v2562 = vsel %vm1436, %v2135, %v2561
    %v2563 = vsel %vm1438, %v2141, %v2562
    %v2564 = vsel %vm1440, %v2147, %v2563
    %v2565 = vsel %vm1442, %v2153, %v2564
    %v2566 = vsel %vm1444, %v2159, %v2565
    %v2567 = vsel %vm1432, %v2171, %v2165
    %v2568 = vsel %vm1434, %v2177, %v2567
    %v2569 = vsel %vm1436, %v2183, %v2568
    %v2570 = vsel %vm1438, %v2189, %v2569
    %v2571 = vsel %vm1440, %v2195, %v2570
    %v2572 = vsel %vm1442, %v2201, %v2571
    %v2573 = vsel %vm1444, %v2207, %v2572
    %v2574 = vsel %vm1432, %v2219, %v2213
    %v2575 = vsel %vm1434, %v2225, %v2574
    %v2576 = vsel %vm1436, %v2231, %v2575
    %v2577 = vsel %vm1438, %v2237, %v2576
    %v2578 = vsel %vm1440, %v2243, %v2577
    %v2579 = vsel %vm1442, %v2249, %v2578
    %v2580 = vsel %vm1444, %v2255, %v2579
    %v2581 = vsel %vm1432, %v2267, %v2261
    %v2582 = vsel %vm1434, %v2273, %v2581
    %v2583 = vsel %vm1436, %v2279, %v2582
    %v2584 = vsel %vm1438, %v2285, %v2583
    %v2585 = vsel %vm1440, %v2291, %v2584
    %v2586 = vsel %vm1442, %v2297, %v2585
    %v2587 = vsel %vm1444, %v2303, %v2586
    %v2588 = vsel %vm1432, %v2315, %v2309
    %v2589 = vsel %vm1434, %v2321, %v2588
    %v2590 = vsel %vm1436, %v2327, %v2589
    %v2591 = vsel %vm1438, %v2333, %v2590
    %v2592 = vsel %vm1440, %v2339, %v2591
    %v2593 = vsel %vm1442, %v2345, %v2592
    %v2594 = vsel %vm1444, %v2351, %v2593
    %v2595 = vsel %vm1432, %v2363, %v2357
    %v2596 = vsel %vm1434, %v2369, %v2595
    %v2597 = vsel %vm1436, %v2375, %v2596
    %v2598 = vsel %vm1438, %v2381, %v2597
    %v2599 = vsel %vm1440, %v2387, %v2598
    %v2600 = vsel %vm1442, %v2393, %v2599
    %v2601 = vsel %vm1444, %v2399, %v2600
    %v2602 = vsel %vm1432, %v2411, %v2405
    %v2603 = vsel %vm1434, %v2417, %v2602
    %v2604 = vsel %vm1436, %v2423, %v2603
    %v2605 = vsel %vm1438, %v2429, %v2604
    %v2606 = vsel %vm1440, %v2435, %v2605
    %v2607 = vsel %vm1442, %v2441, %v2606
    %v2608 = vsel %vm1444, %v2447, %v2607
    %v2609 = vsel %vm1432, %v2459, %v2453
    %v2610 = vsel %vm1434, %v2465, %v2609
    %v2611 = vsel %vm1436, %v2471, %v2610
    %v2612 = vsel %vm1438, %v2477, %v2611
    %v2613 = vsel %vm1440, %v2483, %v2612
    %v2614 = vsel %vm1442, %v2489, %v2613
    %v2615 = vsel %vm1444, %v2495, %v2614
    %2624 = vst [vmem:[#allocation7] sm:$0xff] %v2566
    %2625 = vst [vmem:[#allocation7 + $0x8] sm:$0xff] %v2573
    %2626 = vst [vmem:[#allocation7 + $0x10] sm:$0xff] %v2580
    %2627 = vst [vmem:[#allocation7 + $0x18] sm:$0xff] %v2587
    %2628 = vst [vmem:[#allocation7 + $0x20] sm:$0xff] %v2594
    %2629 = vst [vmem:[#allocation7 + $0x28] sm:$0xff] %v2601
    %2630 = vst [vmem:[#allocation7 + $0x30] sm:$0xff] %v2608
    %2631 = vst [vmem:[#allocation7 + $0x38] sm:$0xff] %v2615
    // Predicated region
    $region26: #{tpu_custom_call.1} parent=1 // pred_check
      _
    $region27: #{tpu_custom_call.1} parent=1 // pred_check_branch
      %2633 = sbr.rel (0) target = $region29
    $region28: #{tpu_custom_call.1} parent=1 // pred_region
      %s2635 = ssub.s32 1024, 1024
      %2636 = vsyncadd [#allocation4], %s2635
      %s2637 = sshll.u32 [#allocation7], 4
      %s2638 = int_to_ptr.vmem [resolvable:$true] %s2637
      %2643 = dma.vmem_to_hbm [thread:$0]  %s2638, 1024, %s4, [#allocation4], 128, 128, 8
    $region29: #{tpu_custom_call.1} parent=1 // pred_fallthru
      _
    // Predicated region
    $region30: #{tpu_custom_call.1} parent=1 // pred_check
      _
    $region31: #{tpu_custom_call.1} parent=1 // pred_check_branch
      %2645 = sbr.rel (0) target = $region33
    $region32: #{tpu_custom_call.1} parent=1 // pred_region
      %2646 = dma.done [#allocation4], 1024
    $region33: #{tpu_custom_call.1} parent=1 // pred_fallthru
      _
    %2647 = vsyncpa [#allocation3], 1
    %2648 = vsyncpa [#allocation6], 1
    %2649 = vsyncpa [#allocation4], 1

</llo_original>
